<compile_context>
chip_gen: v6e
topology: v6e:2x2x1
jax: 0.10.0
libtpu: 0.0.40
codegen_flags: <defaults>
</compile_context>

<pallas_src>
import functools
import math

import jax
import jax.numpy as jnp
from jax import lax
from jax.experimental import pallas as pl
from jax.experimental.pallas import tpu as pltpu

LN_EPS = 1e-5


def _encoder_layer_kernel(
    x_ref,      # (N, D)   N = S*B, rows in native order s*B + b
    wqkv_ref,   # (D, 3D)  [Wq^T * scale | Wk^T | Wv^T]
    wo_ref,     # (D, D)   out_proj.weight.T
    w1_ref,     # (D, F)   linear1.weight.T
    w2_ref,     # (F, D)   linear2.weight.T
    hmask_ref,  # (H, D)   0/1 head-column masks
    vec_ref,    # (8, W)   packed [bqkv*, bo, b1, b2, ln1w, ln1b, ln2w, ln2b]
    o_ref,      # (N, D)
    *, batch, heads,
):
    x = x_ref[...].astype(jnp.float32)            # (N, D)
    N, D = x.shape
    F = w1_ref.shape[1]
    H = heads
    B = batch

    # ---- unpack the single small-vector slab (one DMA for 8 vectors) ----
    vec = vec_ref[...]
    bqkv = vec[0:1, :3 * D]                       # scale already folded into Q part
    bo   = vec[1:2, :D]
    b1   = vec[2:3, :F]
    b2   = vec[3:4, :D]
    ln1w = vec[4:5, :D]
    ln1b = vec[5:6, :D]
    ln2w = vec[6:7, :D]
    ln2b = vec[7:8, :D]

    # ---- fused QKV projection: one (N, D) @ (D, 3D) matmul ----
    qkv = jnp.dot(x, wqkv_ref[...], preferred_element_type=jnp.float32) + bqkv
    q = qkv[:, 0 * D:1 * D]                       # (N, D), pre-scaled by 1/sqrt(hd)
    k = qkv[:, 1 * D:2 * D]
    v = qkv[:, 2 * D:3 * D]

    hmask = hmask_ref[...]                        # (H, D)

    # ---- fused multi-head self-attention over ALL batches & heads ----
    # head-stacked queries, row h*N + n; (H, N, D) -> (H*N, D) is a free reshape
    q_stack = (q[None, :, :] * hmask[:, None, :]).reshape(H * N, D)

    # one scores contraction for every (head, query, key) triple
    s = lax.dot_general(q_stack, k, (((1,), (1,)), ((), ())),
                        preferred_element_type=jnp.float32)          # (H*N, N)

    # block-diagonal batch mask: row r = h*N + s*B + b  ->  batch = r % B
    row_b = lax.broadcasted_iota(jnp.int32, s.shape, 0) % B
    col_b = lax.broadcasted_iota(jnp.int32, s.shape, 1) % B
    s = jnp.where(row_b == col_b, s, -1e30)

    s = s - jnp.max(s, axis=-1, keepdims=True)
    p = jnp.exp(s)
    p = p * pl.reciprocal(jnp.sum(p, axis=-1, keepdims=True))        # exact (EUP)

    # one context contraction; pick each head's columns back with hmask
    o_stack = jnp.dot(p, v, preferred_element_type=jnp.float32)      # (H*N, D)
    ctx = jnp.sum(o_stack.reshape(H, N, D) * hmask[:, None, :], axis=0)  # (N, D)

    attn = jnp.dot(ctx, wo_ref[...], preferred_element_type=jnp.float32) + bo

    # TODO(synk): dropout layers are identity here (inference / eval mode)

    # ---- residual + LayerNorm1 (post-norm) ----
    y = x + attn
    mu = jnp.mean(y, axis=-1, keepdims=True)
    var = jnp.mean((y - mu) ** 2, axis=-1, keepdims=True)
    y = (y - mu) * lax.rsqrt(var + LN_EPS) * ln1w + ln1b

    # ---- feed-forward (relu) ----
    h1 = jnp.maximum(
        jnp.dot(y, w1_ref[...], preferred_element_type=jnp.float32) + b1, 0.0)
    h2 = jnp.dot(h1, w2_ref[...], preferred_element_type=jnp.float32) + b2

    # ---- residual + LayerNorm2 ----
    z = y + h2
    mu2 = jnp.mean(z, axis=-1, keepdims=True)
    var2 = jnp.mean((z - mu2) ** 2, axis=-1, keepdims=True)
    z = (z - mu2) * lax.rsqrt(var2 + LN_EPS) * ln2w + ln2b

    o_ref[...] = z.astype(o_ref.dtype)


def _full_spec(shape):
    # whole-array block, resident in VMEM for the single grid step
    ndim = len(shape)
    return pl.BlockSpec(shape, lambda i: (0,) * ndim)


def transformer_encoder_forward(x_sbd, params, num_heads):
    """x_sbd: (seq_len, batch, d_model) -> same shape (batch_first=False)."""
    S, B, D = x_sbd.shape
    x = x_sbd.reshape(S * B, D)            # free reshape, native row order s*B + b

    args = (x, params["wqkv"], params["wo"], params["w1"], params["w2"],
            params["hmask"], params["vec"])
    in_specs = [_full_spec(a.shape) for a in args]

    kernel = functools.partial(_encoder_layer_kernel, batch=B, heads=num_heads)

    out = pl.pallas_call(
        kernel,
        out_shape=jax.ShapeDtypeStruct((S * B, D), jnp.float32),
        grid_spec=pltpu.PrefetchScalarGridSpec(
            num_scalar_prefetch=0,
            grid=(1,),                                    # single fused invocation
            in_specs=in_specs,
            out_specs=_full_spec((S * B, D)),
        ),
        compiler_params=pltpu.CompilerParams(
            dimension_semantics=("arbitrary",)),
    )(*args)

    return out.reshape(S, B, D)            # free reshape back, no transpose


def make_params(key, d_model, num_heads, dim_ff):
    """Deterministic synthetic weights, laid out as the kernel expects."""
    H = num_heads
    hd = d_model // H
    scale = 1.0 / math.sqrt(hd)
    ks = jax.random.split(key, 12)

    def rnd(k, shape, s=0.1):
        return jax.random.normal(k, shape, jnp.float32) * s

    # torch stores in_proj_weight (3D, D); q = x @ Wq.T + bq, etc.
    Wq = rnd(ks[0], (d_model, d_model))
    Wk = rnd(ks[1], (d_model, d_model))
    Wv = rnd(ks[2], (d_model, d_model))
    bq = rnd(ks[3], (d_model,))
    bk = rnd(ks[4], (d_model,))
    bv = rnd(ks[5], (d_model,))
    Wo = rnd(ks[6], (d_model, d_model))        # out_proj.weight (D_out, D_in)
    bo = rnd(ks[7], (d_model,))
    W1 = rnd(ks[8], (dim_ff, d_model))         # linear1.weight
    b1 = rnd(ks[9], (dim_ff,))
    W2 = rnd(ks[10], (d_model, dim_ff))        # linear2.weight
    b2 = rnd(ks[11], (d_model,))
    ln1w = jnp.ones((d_model,), jnp.float32)
    ln1b = jnp.zeros((d_model,), jnp.float32)
    ln2w = jnp.ones((d_model,), jnp.float32)
    ln2b = jnp.zeros((d_model,), jnp.float32)

    # head-column selection masks (H, D): 1 where column belongs to head h
    hmask = (jnp.arange(d_model)[None, :] // hd
             == jnp.arange(H)[:, None]).astype(jnp.float32)

    # fused QKV weight with 1/sqrt(head_dim) folded into the Q block
    wqkv = jnp.concatenate([Wq.T * scale, Wk.T, Wv.T], axis=1)   # (D, 3D)
    bqkv = jnp.concatenate([bq * scale, bk, bv])                 # (3D,)

    # pack all 8 small per-feature vectors into one (8, W) slab -> one DMA
    slab_w = max(3 * d_model, dim_ff, d_model)

    def pad(v):
        return jnp.pad(v, (0, slab_w - v.shape[0]))

    vec = jnp.stack([pad(bqkv), pad(bo), pad(b1), pad(b2),
                     pad(ln1w), pad(ln1b), pad(ln2w), pad(ln2b)], axis=0)

    params = dict(
        wqkv=wqkv,
        wo=Wo.T,                        # (D, D)
        w1=W1.T,                        # (D, F)
        w2=W2.T,                        # (F, D)
        hmask=hmask,                    # (H, D)
        vec=vec,                        # (8, slab_w)
    )
    raw = dict(Wq=Wq, Wk=Wk, Wv=Wv, bq=bq, bk=bk, bv=bv, Wo=Wo, bo=bo,
               W1=W1, b1=b1, W2=W2, b2=b2)
    return params, raw


def reference_forward(x_sbd, raw, num_heads):
    """Pure-JAX reference replicating torch TransformerEncoderLayer (eval, post-norm, relu)."""
    S, B, D = x_sbd.shape
    H = num_heads
    hd = D // H
    x = jnp.transpose(x_sbd, (1, 0, 2))        # (B, S, D)

    def ln(v, w, b):
        mu = jnp.mean(v, -1, keepdims=True)
        var = jnp.mean((v - mu) ** 2, -1, keepdims=True)
        return (v - mu) / jnp.sqrt(var + LN_EPS) * w + b

    q = x @ raw["Wq"].T + raw["bq"]
    k = x @ raw["Wk"].T + raw["bk"]
    v = x @ raw["Wv"].T + raw["bv"]
    qh = q.reshape(B, S, H, hd).transpose(0, 2, 1, 3)
    kh = k.reshape(B, S, H, hd).transpose(0, 2, 1, 3)
    vh = v.reshape(B, S, H, hd).transpose(0, 2, 1, 3)
    s = jnp.einsum("bhqd,bhkd->bhqk", qh, kh) / math.sqrt(hd)
    p = jax.nn.softmax(s, axis=-1)
    oh = jnp.einsum("bhqk,bhkd->bhqd", p, vh)
    o = oh.transpose(0, 2, 1, 3).reshape(B, S, D)
    attn = o @ raw["Wo"].T + raw["bo"]

    y = ln(x + attn, jnp.ones((D,)), jnp.zeros((D,)))
    ff = jnp.maximum(y @ raw["W1"].T + raw["b1"], 0.0) @ raw["W2"].T + raw["b2"]
    z = ln(y + ff, jnp.ones((D,)), jnp.zeros((D,)))
    return jnp.transpose(z, (1, 0, 2))


if __name__ == "__main__":
    # Transformer(input_size=32, hidden_size=64, num_heads=8, num_layers=1)
    SEQ, BATCH, D_MODEL, N_HEADS, D_FF = 8, 2, 32, 8, 64

    key = jax.random.PRNGKey(0)
    kx, kp = jax.random.split(key)
    x = jax.random.normal(kx, (SEQ, BATCH, D_MODEL), jnp.float32)  # (seq, batch, d)

    params, raw = make_params(kp, D_MODEL, N_HEADS, D_FF)

    fwd = jax.jit(functools.partial(transformer_encoder_forward,
                                    num_heads=N_HEADS))
    out = fwd(x, params)
    out = jax.block_until_ready(out)

    ref = reference_forward(x, raw, N_HEADS)
    assert out.shape == (SEQ, BATCH, D_MODEL)
    assert jnp.allclose(out, ref, atol=1e-4, rtol=1e-4), (
        float(jnp.max(jnp.abs(out - ref))))

    print("KERNEL_OK")
</pallas_src>

<mosaic_0001>
module attributes {stable_mosaic.version = 11 : i64} {
  func.func @_encoder_layer_kernel(%arg0: i32, %arg1: memref<16x32xf32, #tpu.memory_space<vmem>>, %arg2: memref<32x96xf32, #tpu.memory_space<vmem>>, %arg3: memref<32x32xf32, #tpu.memory_space<vmem>>, %arg4: memref<32x64xf32, #tpu.memory_space<vmem>>, %arg5: memref<64x32xf32, #tpu.memory_space<vmem>>, %arg6: memref<8x32xf32, #tpu.memory_space<vmem>>, %arg7: memref<8x96xf32, #tpu.memory_space<vmem>>, %arg8: memref<16x32xf32, #tpu.memory_space<vmem>>) attributes {dimension_semantics = [#tpu.dimension_semantics<arbitrary>], iteration_bounds = array<i64: 1>, scalar_prefetch = 0 : i64, scratch_operands = 0 : i64, tpu.core_type = #tpu.core_type<tc>, window_params = [{pipeline_mode = #tpu.pipeline_mode<synchronous>, transform_indices = @transform_0, window_bounds = array<i64: 16, 32>}, {pipeline_mode = #tpu.pipeline_mode<synchronous>, transform_indices = @transform_1, window_bounds = array<i64: 32, 96>}, {pipeline_mode = #tpu.pipeline_mode<synchronous>, transform_indices = @transform_2, window_bounds = array<i64: 32, 32>}, {pipeline_mode = #tpu.pipeline_mode<synchronous>, transform_indices = @transform_3, window_bounds = array<i64: 32, 64>}, {pipeline_mode = #tpu.pipeline_mode<synchronous>, transform_indices = @transform_4, window_bounds = array<i64: 64, 32>}, {pipeline_mode = #tpu.pipeline_mode<synchronous>, transform_indices = @transform_5, window_bounds = array<i64: 8, 32>}, {pipeline_mode = #tpu.pipeline_mode<synchronous>, transform_indices = @transform_6, window_bounds = array<i64: 8, 96>}, {pipeline_mode = #tpu.pipeline_mode<synchronous>, transform_indices = @transform_7, window_bounds = array<i64: 16, 32>}]} {
    %c0 = arith.constant 0 : index
    %c0_0 = arith.constant 0 : index
    %0 = vector.load %arg1[%c0, %c0_0] : memref<16x32xf32, #tpu.memory_space<vmem>>, vector<16x32xf32>
    %c0_1 = arith.constant 0 : index
    %c0_2 = arith.constant 0 : index
    %1 = vector.load %arg7[%c0_1, %c0_2] : memref<8x96xf32, #tpu.memory_space<vmem>>, vector<8x96xf32>
    %2 = vector.extract_strided_slice %1 {offsets = [0, 0], sizes = [1, 96], strides = [1, 1]} : vector<8x96xf32> to vector<1x96xf32>
    %3 = vector.extract_strided_slice %1 {offsets = [1, 0], sizes = [1, 32], strides = [1, 1]} : vector<8x96xf32> to vector<1x32xf32>
    %4 = vector.extract_strided_slice %1 {offsets = [2, 0], sizes = [1, 64], strides = [1, 1]} : vector<8x96xf32> to vector<1x64xf32>
    %5 = vector.extract_strided_slice %1 {offsets = [3, 0], sizes = [1, 32], strides = [1, 1]} : vector<8x96xf32> to vector<1x32xf32>
    %6 = vector.extract_strided_slice %1 {offsets = [4, 0], sizes = [1, 32], strides = [1, 1]} : vector<8x96xf32> to vector<1x32xf32>
    %7 = vector.extract_strided_slice %1 {offsets = [5, 0], sizes = [1, 32], strides = [1, 1]} : vector<8x96xf32> to vector<1x32xf32>
    %8 = vector.extract_strided_slice %1 {offsets = [6, 0], sizes = [1, 32], strides = [1, 1]} : vector<8x96xf32> to vector<1x32xf32>
    %9 = vector.extract_strided_slice %1 {offsets = [7, 0], sizes = [1, 32], strides = [1, 1]} : vector<8x96xf32> to vector<1x32xf32>
    %c0_3 = arith.constant 0 : index
    %c0_4 = arith.constant 0 : index
    %10 = vector.load %arg2[%c0_3, %c0_4] : memref<32x96xf32, #tpu.memory_space<vmem>>, vector<32x96xf32>
    %cst = arith.constant dense<0.000000e+00> : vector<16x96xf32>
    %11 = tpu.matmul %0, %10, %cst {dimension_numbers = #tpu.dot_dimension_numbers<[1], [0], [0], [1], [0, 0, 1, 1], [], []>} : vector<16x32xf32>, vector<32x96xf32>, vector<16x96xf32> -> vector<16x96xf32>
    %12 = vector.broadcast %2 : vector<1x96xf32> to vector<16x96xf32>
    %13 = arith.addf %11, %12 : vector<16x96xf32>
    %14 = vector.extract_strided_slice %13 {offsets = [0, 0], sizes = [16, 32], strides = [1, 1]} : vector<16x96xf32> to vector<16x32xf32>
    %15 = vector.extract_strided_slice %13 {offsets = [0, 32], sizes = [16, 32], strides = [1, 1]} : vector<16x96xf32> to vector<16x32xf32>
    %16 = vector.extract_strided_slice %13 {offsets = [0, 64], sizes = [16, 32], strides = [1, 1]} : vector<16x96xf32> to vector<16x32xf32>
    %c0_5 = arith.constant 0 : index
    %c0_6 = arith.constant 0 : index
    %17 = vector.load %arg6[%c0_5, %c0_6] : memref<8x32xf32, #tpu.memory_space<vmem>>, vector<8x32xf32>
    %18 = vector.shape_cast %14 : vector<16x32xf32> to vector<1x16x32xf32>
    %19 = vector.shape_cast %17 : vector<8x32xf32> to vector<8x1x32xf32>
    %20 = vector.broadcast %18 : vector<1x16x32xf32> to vector<8x16x32xf32>
    %21 = vector.broadcast %19 : vector<8x1x32xf32> to vector<8x16x32xf32>
    %22 = arith.mulf %20, %21 : vector<8x16x32xf32>
    %23 = vector.shape_cast %22 : vector<8x16x32xf32> to vector<128x32xf32>
    %cst_7 = arith.constant dense<0.000000e+00> : vector<128x16xf32>
    %24 = tpu.matmul %23, %15, %cst_7 {dimension_numbers = #tpu.dot_dimension_numbers<[1], [1], [0], [0], [0, 0, 1, 0], [], []>} : vector<128x32xf32>, vector<16x32xf32>, vector<128x16xf32> -> vector<128x16xf32>
    %25 = tpu.iota {dimensions = array<i32: 0>} : vector<128x16xi32>
    %c2_i32 = arith.constant 2 : i32
    %c0_i32 = arith.constant 0 : i32
    %26 = arith.cmpi eq, %c2_i32, %c0_i32 : i32
    %c1_i32 = arith.constant 1 : i32
    %27 = arith.select %26, %c1_i32, %c2_i32 : i32
    %28 = vector.broadcast %27 : i32 to vector<128x16xi32>
    %29 = arith.remsi %25, %28 : vector<128x16xi32>
    %c0_i32_8 = arith.constant 0 : i32
    %30 = vector.broadcast %c0_i32_8 : i32 to vector<128x16xi32>
    %31 = arith.cmpi ne, %29, %30 : vector<128x16xi32>
    %c0_i32_9 = arith.constant 0 : i32
    %32 = vector.broadcast %c0_i32_9 : i32 to vector<128x16xi32>
    %33 = arith.cmpi slt, %29, %32 : vector<128x16xi32>
    %c0_i32_10 = arith.constant 0 : i32
    %34 = arith.cmpi slt, %27, %c0_i32_10 : i32
    %35 = vector.broadcast %34 : i1 to vector<128x16xi1>
    %36 = vector.broadcast %35 : vector<128x16xi1> to vector<128x16xi1>
    %37 = arith.xori %33, %36 : vector<128x16xi1>
    %38 = arith.andi %37, %31 : vector<128x16xi1>
    %39 = vector.broadcast %27 : i32 to vector<128x16xi32>
    %40 = arith.addi %29, %39 : vector<128x16xi32>
    %41 = arith.select %38, %40, %29 : vector<128x16xi1>, vector<128x16xi32>
    %42 = tpu.iota {dimensions = array<i32: 1>} : vector<128x16xi32>
    %c2_i32_11 = arith.constant 2 : i32
    %c0_i32_12 = arith.constant 0 : i32
    %43 = arith.cmpi eq, %c2_i32_11, %c0_i32_12 : i32
    %c1_i32_13 = arith.constant 1 : i32
    %44 = arith.select %43, %c1_i32_13, %c2_i32_11 : i32
    %45 = vector.broadcast %44 : i32 to vector<128x16xi32>
    %46 = arith.remsi %42, %45 : vector<128x16xi32>
    %c0_i32_14 = arith.constant 0 : i32
    %47 = vector.broadcast %c0_i32_14 : i32 to vector<128x16xi32>
    %48 = arith.cmpi ne, %46, %47 : vector<128x16xi32>
    %c0_i32_15 = arith.constant 0 : i32
    %49 = vector.broadcast %c0_i32_15 : i32 to vector<128x16xi32>
    %50 = arith.cmpi slt, %46, %49 : vector<128x16xi32>
    %c0_i32_16 = arith.constant 0 : i32
    %51 = arith.cmpi slt, %44, %c0_i32_16 : i32
    %52 = vector.broadcast %51 : i1 to vector<128x16xi1>
    %53 = vector.broadcast %52 : vector<128x16xi1> to vector<128x16xi1>
    %54 = arith.xori %50, %53 : vector<128x16xi1>
    %55 = arith.andi %54, %48 : vector<128x16xi1>
    %56 = vector.broadcast %44 : i32 to vector<128x16xi32>
    %57 = arith.addi %46, %56 : vector<128x16xi32>
    %58 = arith.select %55, %57, %46 : vector<128x16xi1>, vector<128x16xi32>
    %59 = arith.cmpi eq, %41, %58 : vector<128x16xi32>
    %cst_17 = arith.constant -1.000000e+30 : f32
    %60 = vector.broadcast %cst_17 : f32 to vector<128x16xf32>
    %61 = arith.select %59, %24, %60 : vector<128x16xi1>, vector<128x16xf32>
    %cst_18 = arith.constant dense<0xFF800000> : vector<128xf32>
    %62 = vector.multi_reduction <maximumf>, %61, %cst_18 [1] : vector<128x16xf32> to vector<128xf32>
    %63 = vector.shape_cast %62 : vector<128xf32> to vector<128x1xf32>
    %64 = vector.broadcast %63 : vector<128x1xf32> to vector<128x16xf32>
    %65 = arith.subf %61, %64 : vector<128x16xf32>
    %66 = math.exp %65 : vector<128x16xf32>
    %cst_19 = arith.constant dense<0.000000e+00> : vector<128xf32>
    %67 = vector.multi_reduction <add>, %66, %cst_19 [1] : vector<128x16xf32> to vector<128xf32>
    %68 = vector.shape_cast %67 : vector<128xf32> to vector<128x1xf32>
    %69 = tpu.reciprocal %68 : vector<128x1xf32> -> vector<128x1xf32>
    %70 = vector.broadcast %69 : vector<128x1xf32> to vector<128x16xf32>
    %71 = arith.mulf %66, %70 : vector<128x16xf32>
    %cst_20 = arith.constant dense<0.000000e+00> : vector<128x32xf32>
    %72 = tpu.matmul %71, %16, %cst_20 {dimension_numbers = #tpu.dot_dimension_numbers<[1], [0], [0], [1], [0, 0, 1, 1], [], []>} : vector<128x16xf32>, vector<16x32xf32>, vector<128x32xf32> -> vector<128x32xf32>
    %73 = vector.shape_cast %72 : vector<128x32xf32> to vector<8x16x32xf32>
    %74 = vector.shape_cast %17 : vector<8x32xf32> to vector<8x1x32xf32>
    %75 = vector.broadcast %74 : vector<8x1x32xf32> to vector<8x16x32xf32>
    %76 = arith.mulf %73, %75 : vector<8x16x32xf32>
    %cst_21 = arith.constant dense<0.000000e+00> : vector<16x32xf32>
    %77 = vector.multi_reduction <add>, %76, %cst_21 [0] : vector<8x16x32xf32> to vector<16x32xf32>
    %c0_22 = arith.constant 0 : index
    %c0_23 = arith.constant 0 : index
    %78 = vector.load %arg3[%c0_22, %c0_23] : memref<32x32xf32, #tpu.memory_space<vmem>>, vector<32x32xf32>
    %cst_24 = arith.constant dense<0.000000e+00> : vector<16x32xf32>
    %79 = tpu.matmul %77, %78, %cst_24 {dimension_numbers = #tpu.dot_dimension_numbers<[1], [0], [0], [1], [0, 0, 1, 1], [], []>} : vector<16x32xf32>, vector<32x32xf32>, vector<16x32xf32> -> vector<16x32xf32>
    %80 = vector.broadcast %3 : vector<1x32xf32> to vector<16x32xf32>
    %81 = arith.addf %79, %80 : vector<16x32xf32>
    %82 = arith.addf %0, %81 : vector<16x32xf32>
    %cst_25 = arith.constant dense<0.000000e+00> : vector<16xf32>
    %83 = vector.multi_reduction <add>, %82, %cst_25 [1] : vector<16x32xf32> to vector<16xf32>
    %84 = vector.shape_cast %83 : vector<16xf32> to vector<16x1xf32>
    %cst_26 = arith.constant 3.200000e+01 : f32
    %85 = vector.broadcast %cst_26 : f32 to vector<16x1xf32>
    %86 = arith.divf %84, %85 : vector<16x1xf32>
    %87 = vector.broadcast %86 : vector<16x1xf32> to vector<16x32xf32>
    %88 = arith.subf %82, %87 : vector<16x32xf32>
    %89 = arith.mulf %88, %88 : vector<16x32xf32>
    %cst_27 = arith.constant dense<0.000000e+00> : vector<16xf32>
    %90 = vector.multi_reduction <add>, %89, %cst_27 [1] : vector<16x32xf32> to vector<16xf32>
    %91 = vector.shape_cast %90 : vector<16xf32> to vector<16x1xf32>
    %cst_28 = arith.constant 3.200000e+01 : f32
    %92 = vector.broadcast %cst_28 : f32 to vector<16x1xf32>
    %93 = arith.divf %91, %92 : vector<16x1xf32>
    %94 = vector.broadcast %86 : vector<16x1xf32> to vector<16x32xf32>
    %95 = arith.subf %82, %94 : vector<16x32xf32>
    %cst_29 = arith.constant 9.99999974E-6 : f32
    %96 = vector.broadcast %cst_29 : f32 to vector<16x1xf32>
    %97 = arith.addf %93, %96 : vector<16x1xf32>
    %98 = math.rsqrt %97 : vector<16x1xf32>
    %99 = vector.broadcast %98 : vector<16x1xf32> to vector<16x32xf32>
    %100 = arith.mulf %95, %99 : vector<16x32xf32>
    %101 = vector.broadcast %6 : vector<1x32xf32> to vector<16x32xf32>
    %102 = arith.mulf %100, %101 : vector<16x32xf32>
    %103 = vector.broadcast %7 : vector<1x32xf32> to vector<16x32xf32>
    %104 = arith.addf %102, %103 : vector<16x32xf32>
    %c0_30 = arith.constant 0 : index
    %c0_31 = arith.constant 0 : index
    %105 = vector.load %arg4[%c0_30, %c0_31] : memref<32x64xf32, #tpu.memory_space<vmem>>, vector<32x64xf32>
    %cst_32 = arith.constant dense<0.000000e+00> : vector<16x64xf32>
    %106 = tpu.matmul %104, %105, %cst_32 {dimension_numbers = #tpu.dot_dimension_numbers<[1], [0], [0], [1], [0, 0, 1, 1], [], []>} : vector<16x32xf32>, vector<32x64xf32>, vector<16x64xf32> -> vector<16x64xf32>
    %107 = vector.broadcast %4 : vector<1x64xf32> to vector<16x64xf32>
    %108 = arith.addf %106, %107 : vector<16x64xf32>
    %cst_33 = arith.constant 0.000000e+00 : f32
    %109 = vector.broadcast %cst_33 : f32 to vector<16x64xf32>
    %110 = arith.maximumf %108, %109 : vector<16x64xf32>
    %c0_34 = arith.constant 0 : index
    %c0_35 = arith.constant 0 : index
    %111 = vector.load %arg5[%c0_34, %c0_35] : memref<64x32xf32, #tpu.memory_space<vmem>>, vector<64x32xf32>
    %cst_36 = arith.constant dense<0.000000e+00> : vector<16x32xf32>
    %112 = tpu.matmul %110, %111, %cst_36 {dimension_numbers = #tpu.dot_dimension_numbers<[1], [0], [0], [1], [0, 0, 1, 1], [], []>} : vector<16x64xf32>, vector<64x32xf32>, vector<16x32xf32> -> vector<16x32xf32>
    %113 = vector.broadcast %5 : vector<1x32xf32> to vector<16x32xf32>
    %114 = arith.addf %112, %113 : vector<16x32xf32>
    %115 = arith.addf %104, %114 : vector<16x32xf32>
    %cst_37 = arith.constant dense<0.000000e+00> : vector<16xf32>
    %116 = vector.multi_reduction <add>, %115, %cst_37 [1] : vector<16x32xf32> to vector<16xf32>
    %117 = vector.shape_cast %116 : vector<16xf32> to vector<16x1xf32>
    %cst_38 = arith.constant 3.200000e+01 : f32
    %118 = vector.broadcast %cst_38 : f32 to vector<16x1xf32>
    %119 = arith.divf %117, %118 : vector<16x1xf32>
    %120 = vector.broadcast %119 : vector<16x1xf32> to vector<16x32xf32>
    %121 = arith.subf %115, %120 : vector<16x32xf32>
    %122 = arith.mulf %121, %121 : vector<16x32xf32>
    %cst_39 = arith.constant dense<0.000000e+00> : vector<16xf32>
    %123 = vector.multi_reduction <add>, %122, %cst_39 [1] : vector<16x32xf32> to vector<16xf32>
    %124 = vector.shape_cast %123 : vector<16xf32> to vector<16x1xf32>
    %cst_40 = arith.constant 3.200000e+01 : f32
    %125 = vector.broadcast %cst_40 : f32 to vector<16x1xf32>
    %126 = arith.divf %124, %125 : vector<16x1xf32>
    %127 = vector.broadcast %119 : vector<16x1xf32> to vector<16x32xf32>
    %128 = arith.subf %115, %127 : vector<16x32xf32>
    %cst_41 = arith.constant 9.99999974E-6 : f32
    %129 = vector.broadcast %cst_41 : f32 to vector<16x1xf32>
    %130 = arith.addf %126, %129 : vector<16x1xf32>
    %131 = math.rsqrt %130 : vector<16x1xf32>
    %132 = vector.broadcast %131 : vector<16x1xf32> to vector<16x32xf32>
    %133 = arith.mulf %128, %132 : vector<16x32xf32>
    %134 = vector.broadcast %8 : vector<1x32xf32> to vector<16x32xf32>
    %135 = arith.mulf %133, %134 : vector<16x32xf32>
    %136 = vector.broadcast %9 : vector<1x32xf32> to vector<16x32xf32>
    %137 = arith.addf %135, %136 : vector<16x32xf32>
    %c0_42 = arith.constant 0 : index
    %c0_43 = arith.constant 0 : index
    %138 = vector.load %arg8[%c0_42, %c0_43] : memref<16x32xf32, #tpu.memory_space<vmem>>, vector<16x32xf32>
    tpu.vector_store %arg8[%c0_42, %c0_43], %137 {strides = array<i32>} : memref<16x32xf32, #tpu.memory_space<vmem>>, vector<16x32xf32>,
    return
  }
  func.func @transform_0(%arg0: i32) -> (i32, i32) {
    %c0_i32 = arith.constant 0 : i32
    %c0_i32_0 = arith.constant 0 : i32
    %c0_i32_1 = arith.constant 0 : i32
    return %c0_i32, %c0_i32_0 : i32, i32
  }
  func.func @transform_1(%arg0: i32) -> (i32, i32) {
    %c0_i32 = arith.constant 0 : i32
    %c0_i32_0 = arith.constant 0 : i32
    %c0_i32_1 = arith.constant 0 : i32
    return %c0_i32, %c0_i32_0 : i32, i32
  }
  func.func @transform_2(%arg0: i32) -> (i32, i32) {
    %c0_i32 = arith.constant 0 : i32
    %c0_i32_0 = arith.constant 0 : i32
    %c0_i32_1 = arith.constant 0 : i32
    return %c0_i32, %c0_i32_0 : i32, i32
  }
  func.func @transform_3(%arg0: i32) -> (i32, i32) {
    %c0_i32 = arith.constant 0 : i32
    %c0_i32_0 = arith.constant 0 : i32
    %c0_i32_1 = arith.constant 0 : i32
    return %c0_i32, %c0_i32_0 : i32, i32
  }
  func.func @transform_4(%arg0: i32) -> (i32, i32) {
    %c0_i32 = arith.constant 0 : i32
    %c0_i32_0 = arith.constant 0 : i32
    %c0_i32_1 = arith.constant 0 : i32
    return %c0_i32, %c0_i32_0 : i32, i32
  }
  func.func @transform_5(%arg0: i32) -> (i32, i32) {
    %c0_i32 = arith.constant 0 : i32
    %c0_i32_0 = arith.constant 0 : i32
    %c0_i32_1 = arith.constant 0 : i32
    return %c0_i32, %c0_i32_0 : i32, i32
  }
  func.func @transform_6(%arg0: i32) -> (i32, i32) {
    %c0_i32 = arith.constant 0 : i32
    %c0_i32_0 = arith.constant 0 : i32
    %c0_i32_1 = arith.constant 0 : i32
    return %c0_i32, %c0_i32_0 : i32, i32
  }
  func.func @transform_7(%arg0: i32) -> (i32, i32) {
    %c0_i32 = arith.constant 0 : i32
    %c0_i32_0 = arith.constant 0 : i32
    %c0_i32_1 = arith.constant 0 : i32
    return %c0_i32, %c0_i32_0 : i32, i32
  }
}

</mosaic_0001>

<llo_original>
// kernel: transformer_encoder_forward.1
$region0: #{transformer_encoder_forward.1}
  #allocation0 [shape = 'u32[]', space=smem, size = 0x4, offset = 0x4, fixed_abs, tag = 'smem constant byte address 0x4 - core index']
  #allocation1 [shape = 'u32[144,128]{1,0:T(1,128)}', space=vmem, size = 0x12000, scoped, tag = 'internal scratch']
  %s0 = inlined_call_operand.hbm [shape: f32[16,32], index: 0, kind: input, shape index: {}]
  %s1 = inlined_call_operand.vmem [shape: f32[32,96], index: 1, kind: input, shape index: {}]
  %s2 = inlined_call_operand.vmem [shape: f32[32,32], index: 2, kind: input, shape index: {}]
  %s3 = inlined_call_operand.vmem [shape: f32[32,64], index: 3, kind: input, shape index: {}]
  %s4 = inlined_call_operand.vmem [shape: f32[64,32], index: 4, kind: input, shape index: {}]
  %s5 = inlined_call_operand.hbm [shape: f32[8,32], index: 5, kind: input, shape index: {}]
  %s6 = inlined_call_operand.hbm [shape: f32[8,96], index: 6, kind: input, shape index: {}]
  %s7 = inlined_call_operand.hbm [shape: f32[16,32], index: 7, kind: output, shape index: {}]
  %s8 = sld [smem:[#allocation0]]
  $region50: #{transformer_encoder_forward.1} parent=0
    _
  %s10 = ssub.s32 1, %s8
  %s11 = scalar_select 0, %s10, %s8
  $region1: #{transformer_encoder_forward.1} parent=0
    #allocation2 [shape = 'u8[8192]{0}', space=vmem, size = 0x2000, scoped, tag = 'input window, operand 0, single buffered']
    #allocation3 [shape = 's32[1]{0}', space=sflag, size = 0x4, scoped, tag = 'scoped memory for transformer_encoder_forward.1']
    #allocation4 [shape = 's32[1]{0}', space=sflag, size = 0x4, scoped, tag = 'scoped memory for transformer_encoder_forward.1']
    #allocation5 [shape = 'u8[4096]{0}', space=vmem, size = 0x1000, scoped, tag = 'input window, operand 5, single buffered']
    #allocation6 [shape = 's32[1]{0}', space=sflag, size = 0x4, scoped, tag = 'scoped memory for transformer_encoder_forward.1']
    #allocation7 [shape = 'u8[4096]{0}', space=vmem, size = 0x1000, scoped, tag = 'input window, operand 6, single buffered']
    #allocation8 [shape = 'u8[8192]{0}', space=vmem, size = 0x2000, scoped, tag = 'output window, operand 0, single buffered']
    %12 = vsyncpa [#allocation3], 0
    %13 = vsyncpa [#allocation6], 0
    %14 = vsyncpa [#allocation4], 0
    // Predicated region
    $region2: #{transformer_encoder_forward.1} parent=1 // pred_check
      _
    $region3: #{transformer_encoder_forward.1} parent=1 // pred_check_branch
      %16 = sbr.rel (0) target = $region5
    $region4: #{transformer_encoder_forward.1} parent=1 // pred_region
      %s18 = ssub.s32 256, 256
      %19 = vsyncadd [#allocation3], %s18
      %s20 = sshll.u32 [#allocation2], 4
      %s21 = int_to_ptr.vmem [resolvable:$true] %s20
      %26 = dma.hbm_to_vmem [thread:$0]  %s0, 256, %s21, [#allocation3], 128, 128, 8
    $region5: #{transformer_encoder_forward.1} parent=1 // pred_fallthru
      _
    // Predicated region
    $region6: #{transformer_encoder_forward.1} parent=1 // pred_check
      _
    $region7: #{transformer_encoder_forward.1} parent=1 // pred_check_branch
      %28 = sbr.rel (0) target = $region9
    $region8: #{transformer_encoder_forward.1} parent=1 // pred_region
      _
    $region9: #{transformer_encoder_forward.1} parent=1 // pred_fallthru
      _
    // Predicated region
    $region10: #{transformer_encoder_forward.1} parent=1 // pred_check
      _
    $region11: #{transformer_encoder_forward.1} parent=1 // pred_check_branch
      %30 = sbr.rel (0) target = $region13
    $region12: #{transformer_encoder_forward.1} parent=1 // pred_region
      _
    $region13: #{transformer_encoder_forward.1} parent=1 // pred_fallthru
      _
    // Predicated region
    $region14: #{transformer_encoder_forward.1} parent=1 // pred_check
      _
    $region15: #{transformer_encoder_forward.1} parent=1 // pred_check_branch
      %32 = sbr.rel (0) target = $region17
    $region16: #{transformer_encoder_forward.1} parent=1 // pred_region
      _
    $region17: #{transformer_encoder_forward.1} parent=1 // pred_fallthru
      _
    // Predicated region
    $region18: #{transformer_encoder_forward.1} parent=1 // pred_check
      _
    $region19: #{transformer_encoder_forward.1} parent=1 // pred_check_branch
      %34 = sbr.rel (0) target = $region21
    $region20: #{transformer_encoder_forward.1} parent=1 // pred_region
      _
    $region21: #{transformer_encoder_forward.1} parent=1 // pred_fallthru
      _
    // Predicated region
    $region22: #{transformer_encoder_forward.1} parent=1 // pred_check
      _
    $region23: #{transformer_encoder_forward.1} parent=1 // pred_check_branch
      %36 = sbr.rel (0) target = $region25
    $region24: #{transformer_encoder_forward.1} parent=1 // pred_region
      %s38 = ssub.s32 128, 128
      %39 = vsyncadd [#allocation6], %s38
      %s41 = sshll.u32 [#allocation5], 4
      %s42 = int_to_ptr.vmem [resolvable:$true] %s41
      %44 = dma.hbm_to_vmem [thread:$0]  %s5, 128, %s42, [#allocation6]
    $region25: #{transformer_encoder_forward.1} parent=1 // pred_fallthru
      _
    // Predicated region
    $region26: #{transformer_encoder_forward.1} parent=1 // pred_check
      _
    $region27: #{transformer_encoder_forward.1} parent=1 // pred_check_branch
      %46 = sbr.rel (0) target = $region29
    $region28: #{transformer_encoder_forward.1} parent=1 // pred_region
      %s48 = ssub.s32 128, 128
      %49 = vsyncadd [#allocation6], %s48
      %s51 = sshll.u32 [#allocation7], 4
      %s52 = int_to_ptr.vmem [resolvable:$true] %s51
      %54 = dma.hbm_to_vmem [thread:$0]  %s6, 128, %s52, [#allocation6]
    $region29: #{transformer_encoder_forward.1} parent=1 // pred_fallthru
      _
    // Predicated region
    $region30: #{transformer_encoder_forward.1} parent=1 // pred_check
      _
    $region31: #{transformer_encoder_forward.1} parent=1 // pred_check_branch
      %56 = sbr.rel (0) target = $region33
    $region32: #{transformer_encoder_forward.1} parent=1 // pred_region
      %57 = dma.done [#allocation3], 256
    $region33: #{transformer_encoder_forward.1} parent=1 // pred_fallthru
      _
    // Predicated region
    $region34: #{transformer_encoder_forward.1} parent=1 // pred_check
      _
    $region35: #{transformer_encoder_forward.1} parent=1 // pred_check_branch
      %59 = sbr.rel (0) target = $region37
    $region36: #{transformer_encoder_forward.1} parent=1 // pred_region
      %60 = dma.done [#allocation6], 128
    $region37: #{transformer_encoder_forward.1} parent=1 // pred_fallthru
      _
    // Predicated region
    $region38: #{transformer_encoder_forward.1} parent=1 // pred_check
      _
    $region39: #{transformer_encoder_forward.1} parent=1 // pred_check_branch
      %62 = sbr.rel (0) target = $region41
    $region40: #{transformer_encoder_forward.1} parent=1 // pred_region
      %63 = dma.done [#allocation6], 128
    $region41: #{transformer_encoder_forward.1} parent=1 // pred_fallthru
      _
    %v64 = vld [vmem:[#allocation2] sm:$0xff]
    %v65 = vld [vmem:[#allocation2 + $0x8] sm:$0xff]
    %v66 = vld [vmem:[#allocation7] sm:$0xff]
    %v67 = vld [vmem:[%s1] sm:$0xff]
    %v68 = vld [vmem:[%s1 + $0x8] sm:$0xff]
    %v69 = vld [vmem:[%s1 + $0x10] sm:$0xff]
    %v70 = vld [vmem:[%s1 + $0x18] sm:$0xff]
    %v71 = vlaneseq
    %v72 = vshrl.u32 %v71, 7
    %v73 = vsub.s32 0, %v72
    %v74 = vrot.slane %v66, %v73
    %vm75 = vcmask 261120
    %v77 = vsel %vm75, %v64, 0
    %v80 = vsel %vm75, %v65, 0
    %82 = vmatprep.subr.mxu0 0.0
    %83 = vmatpush1.msra.mxu0 0.0
    %84 = vmatprep.subr.mxu0 0.0
    %85 = vmatpush1.msra.mxu0 0.0
    %86 = vmatprep.subr.mxu0 0.0
    %87 = vmatpush1.msra.mxu0 0.0
    %88 = vmatprep.subr.mxu0 0.0
    %89 = vmatpush1.msra.mxu0 0.0
    %90 = vmatprep.subr.mxu0 0.0
    %91 = vmatpush1.msra.mxu0 0.0
    %92 = vmatprep.subr.mxu0 0.0
    %93 = vmatpush1.msra.mxu0 0.0
    %94 = vmatprep.subr.mxu0 0.0
    %95 = vmatpush1.msra.mxu0 0.0
    %96 = vmatprep.subr.mxu0 0.0
    %97 = vmatpush1.msra.mxu0 0.0
    %98 = vmatprep.subr.mxu0 0.0
    %99 = vmatpush1.msra.mxu0 0.0
    %100 = vmatprep.subr.mxu0 0.0
    %101 = vmatpush1.msra.mxu0 0.0
    %102 = vmatprep.subr.mxu0 0.0
    %103 = vmatpush1.msra.mxu0 0.0
    %104 = vmatprep.subr.mxu0 0.0
    %105 = vmatpush1.msra.mxu0 0.0
    %106 = vmatprep.subr.mxu0 0.0
    %107 = vmatpush1.msra.mxu0 %v70
    %108 = vmatprep.subr.mxu0 0.0
    %109 = vmatpush1.msra.mxu0 %v69
    %110 = vmatprep.subr.mxu0 0.0
    %111 = vmatpush1.msra.mxu0 %v68
    %112 = vmatprep.subr.mxu0 0.0
    %113 = vmatpush1.msra.mxu0 %v67
    %114 = vmatprep.subr.mxu0 0.0
    %115 = vmatpush2.msra.mxu0 0.0
    %116 = vmatprep.subr.mxu0 0.0
    %117 = vmatpush2.msra.mxu0 0.0
    %118 = vmatprep.subr.mxu0 0.0
    %119 = vmatpush2.msra.mxu0 0.0
    %120 = vmatprep.subr.mxu0 0.0
    %121 = vmatpush2.msra.mxu0 0.0
    %122 = vmatprep.subr.mxu0 0.0
    %123 = vmatpush2.msra.mxu0 0.0
    %124 = vmatprep.subr.mxu0 0.0
    %125 = vmatpush2.msra.mxu0 0.0
    %126 = vmatprep.subr.mxu0 0.0
    %127 = vmatpush2.msra.mxu0 0.0
    %128 = vmatprep.subr.mxu0 0.0
    %129 = vmatpush2.msra.mxu0 0.0
    %130 = vmatprep.subr.mxu0 0.0
    %131 = vmatpush2.msra.mxu0 0.0
    %132 = vmatprep.subr.mxu0 0.0
    %133 = vmatpush2.msra.mxu0 0.0
    %134 = vmatprep.subr.mxu0 0.0
    %135 = vmatpush2.msra.mxu0 0.0
    %136 = vmatprep.subr.mxu0 0.0
    %137 = vmatpush2.msra.mxu0 0.0
    %138 = vmatprep.subr.mxu0 0.0
    %139 = vmatpush2.msra.mxu0 0.0
    %140 = vmatprep.subr.mxu0 0.0
    %141 = vmatpush2.msra.mxu0 0.0
    %142 = vmatprep.subr.mxu0 0.0
    %143 = vmatpush2.msra.mxu0 0.0
    %144 = vmatprep.subr.mxu0 0.0
    %145 = vmatpush2.msra.mxu0 0.0
    %146 = vmatprep.mubr.f32.mxu0 0.0
    %147 = vmatmul.mubr.f32.gmra.mxu0 %v77
    %v148 = vpop.f32.mrf.mxu0
    %v149 = vadd.f32 %v74, %v148
    %v150 = vpop.f32.mrf.mxu0
    %151 = vmatprep.mubr.f32.mxu0 0.0
    %152 = vmatmul.mubr.f32.gmra.mxu0 %v80
    %v153 = vpop.f32.mrf.mxu0
    %v154 = vadd.f32 %v74, %v153
    %v155 = vpop.f32.mrf.mxu0
    %156 = vdwg.mxu0
    %v157 = vld [vmem:[#allocation5] sm:$0xff]
    %v159 = vcombine.high %v157, %v157
    %v161 = vunpack.c.l.s4 1966171168
    %v162 = vunpack.c.0.s8 %v161
    %v163 = vlaneseq
    %v164 = vshrl.u32 %v163, 7
    %v165 = vsub.s32 %v162, %v164
    %v166 = vrot.slane %v157, %v165
    %v168 = vunpack.c.l.s4 1966171168
    %v169 = vunpack.c.0.s8 %v168
    %v170 = vlaneseq
    %v171 = vshrl.u32 %v170, 7
    %v172 = vsub.s32 %v169, %v171
    %v173 = vrot.slane %v159, %v172
    %v174 = vcombine.high %v166, %v166
    %v175 = vcombine.high %v173, %v173
    %v177 = vunpack.c.l.s4 1966171168
    %v178 = vunpack.c.0.s8 %v177
    %v179 = vlaneseq
    %v180 = vshrl.u32 %v179, 7
    %v181 = vsub.s32 %v178, %v180
    %v182 = vrot.slane %v166, %v181
    %v184 = vunpack.c.l.s4 1966171168
    %v185 = vunpack.c.0.s8 %v184
    %v186 = vlaneseq
    %v187 = vshrl.u32 %v186, 7
    %v188 = vsub.s32 %v185, %v187
    %v189 = vrot.slane %v173, %v188
    %v191 = vunpack.c.l.s4 1966171168
    %v192 = vunpack.c.0.s8 %v191
    %v193 = vlaneseq
    %v194 = vshrl.u32 %v193, 7
    %v195 = vsub.s32 %v192, %v194
    %v196 = vrot.slane %v174, %v195
    %v198 = vunpack.c.l.s4 1966171168
    %v199 = vunpack.c.0.s8 %v198
    %v200 = vlaneseq
    %v201 = vshrl.u32 %v200, 7
    %v202 = vsub.s32 %v199, %v201
    %v203 = vrot.slane %v175, %v202
    %v204 = vcombine.high %v182, %v182
    %v205 = vcombine.high %v189, %v189
    %v206 = vcombine.high %v196, %v196
    %v207 = vcombine.high %v203, %v203
    %v208 = vlaneseq
    %v209 = vshrl.u32 %v208, 7
    %v210 = vsub.s32 0, %v209
    %v211 = vrot.slane %v182, %v210
    %v212 = vlaneseq
    %v213 = vshrl.u32 %v212, 7
    %v214 = vsub.s32 0, %v213
    %v215 = vrot.slane %v196, %v214
    %v216 = vlaneseq
    %v217 = vshrl.u32 %v216, 7
    %v218 = vsub.s32 0, %v217
    %v219 = vrot.slane %v204, %v218
    %v220 = vlaneseq
    %v221 = vshrl.u32 %v220, 7
    %v222 = vsub.s32 0, %v221
    %v223 = vrot.slane %v206, %v222
    %v224 = vlaneseq
    %v225 = vshrl.u32 %v224, 7
    %v226 = vsub.s32 0, %v225
    %v227 = vrot.slane %v189, %v226
    %v228 = vlaneseq
    %v229 = vshrl.u32 %v228, 7
    %v230 = vsub.s32 0, %v229
    %v231 = vrot.slane %v203, %v230
    %v232 = vlaneseq
    %v233 = vshrl.u32 %v232, 7
    %v234 = vsub.s32 0, %v233
    %v235 = vrot.slane %v205, %v234
    %v236 = vlaneseq
    %v237 = vshrl.u32 %v236, 7
    %v238 = vsub.s32 0, %v237
    %v239 = vrot.slane %v207, %v238
    %v248 = vmul.f32 %v149, %v211
    %v249 = vmul.f32 %v154, %v211
    %v250 = vmul.f32 %v149, %v215
    %v251 = vmul.f32 %v154, %v215
    %v252 = vmul.f32 %v149, %v219
    %v253 = vmul.f32 %v154, %v219
    %v254 = vmul.f32 %v149, %v223
    %v255 = vmul.f32 %v154, %v223
    %v256 = vmul.f32 %v149, %v227
    %v257 = vmul.f32 %v154, %v227
    %v258 = vmul.f32 %v149, %v231
    %v259 = vmul.f32 %v154, %v231
    %v260 = vmul.f32 %v149, %v235
    %v261 = vmul.f32 %v154, %v235
    %v262 = vmul.f32 %v149, %v239
    %v263 = vmul.f32 %v154, %v239
    %266 = vrot.lane.b32.xlu0 %v149, 96
    %v267 = vpop.permute.xlu0 %266
    %268 = vrot.lane.b32.xlu0 %v154, 96
    %v269 = vpop.permute.xlu0 %268
    %v271 = vsel %vm75, %v248, 0
    %v274 = vsel %vm75, %v249, 0
    %v277 = vsel %vm75, %v250, 0
    %v280 = vsel %vm75, %v251, 0
    %v283 = vsel %vm75, %v252, 0
    %v286 = vsel %vm75, %v253, 0
    %v289 = vsel %vm75, %v254, 0
    %v292 = vsel %vm75, %v255, 0
    %v295 = vsel %vm75, %v256, 0
    %v298 = vsel %vm75, %v257, 0
    %v301 = vsel %vm75, %v258, 0
    %v304 = vsel %vm75, %v259, 0
    %v307 = vsel %vm75, %v260, 0
    %v310 = vsel %vm75, %v261, 0
    %v313 = vsel %vm75, %v262, 0
    %v316 = vsel %vm75, %v263, 0
    %v318 = vsel %vm75, %v267, 0
    %v320 = vsel %vm75, %v269, 0
    %322 = vmatprep.subr.mxu0 0.0
    %323 = vmatpush1.xpose.msra.mxu0 0.0
    %324 = vmatprep.subr.mxu0 0.0
    %325 = vmatpush1.xpose.msra.mxu0 0.0
    %326 = vmatprep.subr.mxu0 0.0
    %327 = vmatpush1.xpose.msra.mxu0 0.0
    %328 = vmatprep.subr.mxu0 0.0
    %329 = vmatpush1.xpose.msra.mxu0 0.0
    %330 = vmatprep.subr.mxu0 0.0
    %331 = vmatpush1.xpose.msra.mxu0 0.0
    %332 = vmatprep.subr.mxu0 0.0
    %333 = vmatpush1.xpose.msra.mxu0 0.0
    %334 = vmatprep.subr.mxu0 0.0
    %335 = vmatpush1.xpose.msra.mxu0 0.0
    %336 = vmatprep.subr.mxu0 0.0
    %337 = vmatpush1.xpose.msra.mxu0 0.0
    %338 = vmatprep.subr.mxu0 0.0
    %339 = vmatpush1.xpose.msra.mxu0 0.0
    %340 = vmatprep.subr.mxu0 0.0
    %341 = vmatpush1.xpose.msra.mxu0 0.0
    %342 = vmatprep.subr.mxu0 0.0
    %343 = vmatpush1.xpose.msra.mxu0 0.0
    %344 = vmatprep.subr.mxu0 0.0
    %345 = vmatpush1.xpose.msra.mxu0 0.0
    %346 = vmatprep.subr.mxu0 0.0
    %347 = vmatpush1.xpose.msra.mxu0 0.0
    %348 = vmatprep.subr.mxu0 0.0
    %349 = vmatpush1.xpose.msra.mxu0 0.0
    %350 = vmatprep.subr.mxu0 0.0
    %351 = vmatpush1.xpose.msra.mxu0 %v320
    %352 = vmatprep.subr.mxu0 0.0
    %353 = vmatpush1.xpose.msra.mxu0 %v318
    %354 = vmatprep.subr.mxu0 0.0
    %355 = vmatpush2.xpose.msra.mxu0 0.0
    %356 = vmatprep.subr.mxu0 0.0
    %357 = vmatpush2.xpose.msra.mxu0 0.0
    %358 = vmatprep.subr.mxu0 0.0
    %359 = vmatpush2.xpose.msra.mxu0 0.0
    %360 = vmatprep.subr.mxu0 0.0
    %361 = vmatpush2.xpose.msra.mxu0 0.0
    %362 = vmatprep.subr.mxu0 0.0
    %363 = vmatpush2.xpose.msra.mxu0 0.0
    %364 = vmatprep.subr.mxu0 0.0
    %365 = vmatpush2.xpose.msra.mxu0 0.0
    %366 = vmatprep.subr.mxu0 0.0
    %367 = vmatpush2.xpose.msra.mxu0 0.0
    %368 = vmatprep.subr.mxu0 0.0
    %369 = vmatpush2.xpose.msra.mxu0 0.0
    %370 = vmatprep.subr.mxu0 0.0
    %371 = vmatpush2.xpose.msra.mxu0 0.0
    %372 = vmatprep.subr.mxu0 0.0
    %373 = vmatpush2.xpose.msra.mxu0 0.0
    %374 = vmatprep.subr.mxu0 0.0
    %375 = vmatpush2.xpose.msra.mxu0 0.0
    %376 = vmatprep.subr.mxu0 0.0
    %377 = vmatpush2.xpose.msra.mxu0 0.0
    %378 = vmatprep.subr.mxu0 0.0
    %379 = vmatpush2.xpose.msra.mxu0 0.0
    %380 = vmatprep.subr.mxu0 0.0
    %381 = vmatpush2.xpose.msra.mxu0 0.0
    %382 = vmatprep.subr.mxu0 0.0
    %383 = vmatpush2.xpose.msra.mxu0 0.0
    %384 = vmatprep.subr.mxu0 0.0
    %385 = vmatpush2.xpose.msra.mxu0 0.0
    %386 = vmatprep.mubr.f32.mxu0 0.0
    %387 = vmatmul.mubr.f32.gmra.mxu0 %v271
    %v388 = vpop.f32.mrf.mxu0
    %v389 = vadd.f32 0.0, %v388
    %v390 = vpop.f32.mrf.mxu0
    %391 = vmatprep.mubr.f32.mxu0 0.0
    %392 = vmatmul.mubr.f32.gmra.mxu0 %v274
    %v393 = vpop.f32.mrf.mxu0
    %v394 = vadd.f32 0.0, %v393
    %v395 = vpop.f32.mrf.mxu0
    %396 = vmatprep.mubr.f32.mxu0 0.0
    %397 = vmatmul.mubr.f32.gmra.mxu0 %v277
    %v398 = vpop.f32.mrf.mxu0
    %v399 = vadd.f32 0.0, %v398
    %v400 = vpop.f32.mrf.mxu0
    %401 = vmatprep.mubr.f32.mxu0 0.0
    %402 = vmatmul.mubr.f32.gmra.mxu0 %v280
    %v403 = vpop.f32.mrf.mxu0
    %v404 = vadd.f32 0.0, %v403
    %v405 = vpop.f32.mrf.mxu0
    %406 = vmatprep.mubr.f32.mxu0 0.0
    %407 = vmatmul.mubr.f32.gmra.mxu0 %v283
    %v408 = vpop.f32.mrf.mxu0
    %v409 = vadd.f32 0.0, %v408
    %v410 = vpop.f32.mrf.mxu0
    %411 = vmatprep.mubr.f32.mxu0 0.0
    %412 = vmatmul.mubr.f32.gmra.mxu0 %v286
    %v413 = vpop.f32.mrf.mxu0
    %v414 = vadd.f32 0.0, %v413
    %v415 = vpop.f32.mrf.mxu0
    %416 = vmatprep.mubr.f32.mxu0 0.0
    %417 = vmatmul.mubr.f32.gmra.mxu0 %v289
    %v418 = vpop.f32.mrf.mxu0
    %v419 = vadd.f32 0.0, %v418
    %v420 = vpop.f32.mrf.mxu0
    %421 = vmatprep.mubr.f32.mxu0 0.0
    %422 = vmatmul.mubr.f32.gmra.mxu0 %v292
    %v423 = vpop.f32.mrf.mxu0
    %v424 = vadd.f32 0.0, %v423
    %v425 = vpop.f32.mrf.mxu0
    %426 = vmatprep.mubr.f32.mxu0 0.0
    %427 = vmatmul.mubr.f32.gmra.mxu0 %v295
    %v428 = vpop.f32.mrf.mxu0
    %v429 = vadd.f32 0.0, %v428
    %v430 = vpop.f32.mrf.mxu0
    %431 = vmatprep.mubr.f32.mxu0 0.0
    %432 = vmatmul.mubr.f32.gmra.mxu0 %v298
    %v433 = vpop.f32.mrf.mxu0
    %v434 = vadd.f32 0.0, %v433
    %v435 = vpop.f32.mrf.mxu0
    %436 = vmatprep.mubr.f32.mxu0 0.0
    %437 = vmatmul.mubr.f32.gmra.mxu0 %v301
    %v438 = vpop.f32.mrf.mxu0
    %v439 = vadd.f32 0.0, %v438
    %v440 = vpop.f32.mrf.mxu0
    %441 = vmatprep.mubr.f32.mxu0 0.0
    %442 = vmatmul.mubr.f32.gmra.mxu0 %v304
    %v443 = vpop.f32.mrf.mxu0
    %v444 = vadd.f32 0.0, %v443
    %v445 = vpop.f32.mrf.mxu0
    %446 = vmatprep.mubr.f32.mxu0 0.0
    %447 = vmatmul.mubr.f32.gmra.mxu0 %v307
    %v448 = vpop.f32.mrf.mxu0
    %v449 = vadd.f32 0.0, %v448
    %v450 = vpop.f32.mrf.mxu0
    %451 = vmatprep.mubr.f32.mxu0 0.0
    %452 = vmatmul.mubr.f32.gmra.mxu0 %v310
    %v453 = vpop.f32.mrf.mxu0
    %v454 = vadd.f32 0.0, %v453
    %v455 = vpop.f32.mrf.mxu0
    %456 = vmatprep.mubr.f32.mxu0 0.0
    %457 = vmatmul.mubr.f32.gmra.mxu0 %v313
    %v458 = vpop.f32.mrf.mxu0
    %v459 = vadd.f32 0.0, %v458
    %v460 = vpop.f32.mrf.mxu0
    %461 = vmatprep.mubr.f32.mxu0 0.0
    %462 = vmatmul.mubr.f32.gmra.mxu0 %v316
    %v463 = vpop.f32.mrf.mxu0
    %v464 = vadd.f32 0.0, %v463
    %v465 = vpop.f32.mrf.mxu0
    %466 = vdwg.mxu0
    %v467 = vlaneseq
    %v468 = vshrl.u32 %v467, 7
    %v469 = vadd.s32 %v468, 8
    %v470 = vadd.s32 %v468, 16
    %v471 = vadd.s32 %v468, 24
    %v472 = vadd.s32 %v468, 32
    %v473 = vadd.s32 %v468, 40
    %v474 = vadd.s32 %v468, 48
    %v475 = vadd.s32 %v468, 56
    %v476 = vadd.s32 %v468, 64
    %v477 = vadd.s32 %v468, 72
    %v478 = vadd.s32 %v468, 80
    %v479 = vadd.s32 %v468, 88
    %v480 = vadd.s32 %v468, 96
    %v481 = vadd.s32 %v468, 104
    %v482 = vadd.s32 %v468, 112
    %v483 = vadd.s32 %v468, 120
    %vm484 = vcmp.lt.s32.totalorder %v468, 0
    %v485 = vsub.s32 0, %v468
    %v486 = vsel %vm484, %v485, %v468
    %v487 = vshrl.u32 %v486, 1
    %v488 = vand.u32 %v486, 1
    %v489 = vsub.s32 0, %v488
    %v490 = vsel %vm484, %v489, %v488
    %vm491 = vcmp.lt.s32.totalorder %v469, 0
    %v492 = vsub.s32 0, %v469
    %v493 = vsel %vm491, %v492, %v469
    %v494 = vshrl.u32 %v493, 1
    %v495 = vand.u32 %v493, 1
    %v496 = vsub.s32 0, %v495
    %v497 = vsel %vm491, %v496, %v495
    %vm498 = vcmp.lt.s32.totalorder %v470, 0
    %v499 = vsub.s32 0, %v470
    %v500 = vsel %vm498, %v499, %v470
    %v501 = vshrl.u32 %v500, 1
    %v502 = vand.u32 %v500, 1
    %v503 = vsub.s32 0, %v502
    %v504 = vsel %vm498, %v503, %v502
    %vm505 = vcmp.lt.s32.totalorder %v471, 0
    %v506 = vsub.s32 0, %v471
    %v507 = vsel %vm505, %v506, %v471
    %v508 = vshrl.u32 %v507, 1
    %v509 = vand.u32 %v507, 1
    %v510 = vsub.s32 0, %v509
    %v511 = vsel %vm505, %v510, %v509
    %vm512 = vcmp.lt.s32.totalorder %v472, 0
    %v513 = vsub.s32 0, %v472
    %v514 = vsel %vm512, %v513, %v472
    %v515 = vshrl.u32 %v514, 1
    %v516 = vand.u32 %v514, 1
    %v517 = vsub.s32 0, %v516
    %v518 = vsel %vm512, %v517, %v516
    %vm519 = vcmp.lt.s32.totalorder %v473, 0
    %v520 = vsub.s32 0, %v473
    %v521 = vsel %vm519, %v520, %v473
    %v522 = vshrl.u32 %v521, 1
    %v523 = vand.u32 %v521, 1
    %v524 = vsub.s32 0, %v523
    %v525 = vsel %vm519, %v524, %v523
    %vm526 = vcmp.lt.s32.totalorder %v474, 0
    %v527 = vsub.s32 0, %v474
    %v528 = vsel %vm526, %v527, %v474
    %v529 = vshrl.u32 %v528, 1
    %v530 = vand.u32 %v528, 1
    %v531 = vsub.s32 0, %v530
    %v532 = vsel %vm526, %v531, %v530
    %vm533 = vcmp.lt.s32.totalorder %v475, 0
    %v534 = vsub.s32 0, %v475
    %v535 = vsel %vm533, %v534, %v475
    %v536 = vshrl.u32 %v535, 1
    %v537 = vand.u32 %v535, 1
    %v538 = vsub.s32 0, %v537
    %v539 = vsel %vm533, %v538, %v537
    %vm540 = vcmp.lt.s32.totalorder %v476, 0
    %v541 = vsub.s32 0, %v476
    %v542 = vsel %vm540, %v541, %v476
    %v543 = vshrl.u32 %v542, 1
    %v544 = vand.u32 %v542, 1
    %v545 = vsub.s32 0, %v544
    %v546 = vsel %vm540, %v545, %v544
    %vm547 = vcmp.lt.s32.totalorder %v477, 0
    %v548 = vsub.s32 0, %v477
    %v549 = vsel %vm547, %v548, %v477
    %v550 = vshrl.u32 %v549, 1
    %v551 = vand.u32 %v549, 1
    %v552 = vsub.s32 0, %v551
    %v553 = vsel %vm547, %v552, %v551
    %vm554 = vcmp.lt.s32.totalorder %v478, 0
    %v555 = vsub.s32 0, %v478
    %v556 = vsel %vm554, %v555, %v478
    %v557 = vshrl.u32 %v556, 1
    %v558 = vand.u32 %v556, 1
    %v559 = vsub.s32 0, %v558
    %v560 = vsel %vm554, %v559, %v558
    %vm561 = vcmp.lt.s32.totalorder %v479, 0
    %v562 = vsub.s32 0, %v479
    %v563 = vsel %vm561, %v562, %v479
    %v564 = vshrl.u32 %v563, 1
    %v565 = vand.u32 %v563, 1
    %v566 = vsub.s32 0, %v565
    %v567 = vsel %vm561, %v566, %v565
    %vm568 = vcmp.lt.s32.totalorder %v480, 0
    %v569 = vsub.s32 0, %v480
    %v570 = vsel %vm568, %v569, %v480
    %v571 = vshrl.u32 %v570, 1
    %v572 = vand.u32 %v570, 1
    %v573 = vsub.s32 0, %v572
    %v574 = vsel %vm568, %v573, %v572
    %vm575 = vcmp.lt.s32.totalorder %v481, 0
    %v576 = vsub.s32 0, %v481
    %v577 = vsel %vm575, %v576, %v481
    %v578 = vshrl.u32 %v577, 1
    %v579 = vand.u32 %v577, 1
    %v580 = vsub.s32 0, %v579
    %v581 = vsel %vm575, %v580, %v579
    %vm582 = vcmp.lt.s32.totalorder %v482, 0
    %v583 = vsub.s32 0, %v482
    %v584 = vsel %vm582, %v583, %v482
    %v585 = vshrl.u32 %v584, 1
    %v586 = vand.u32 %v584, 1
    %v587 = vsub.s32 0, %v586
    %v588 = vsel %vm582, %v587, %v586
    %vm589 = vcmp.lt.s32.totalorder %v483, 0
    %v590 = vsub.s32 0, %v483
    %v591 = vsel %vm589, %v590, %v483
    %v592 = vshrl.u32 %v591, 1
    %v593 = vand.u32 %v591, 1
    %v594 = vsub.s32 0, %v593
    %v595 = vsel %vm589, %v594, %v593
    %vm596 = vcmp.ne.s32.totalorder %v490, 0
    %vm597 = vcmp.ne.s32.totalorder %v497, 0
    %vm598 = vcmp.ne.s32.totalorder %v504, 0
    %vm599 = vcmp.ne.s32.totalorder %v511, 0
    %vm600 = vcmp.ne.s32.totalorder %v518, 0
    %vm601 = vcmp.ne.s32.totalorder %v525, 0
    %vm602 = vcmp.ne.s32.totalorder %v532, 0
    %vm603 = vcmp.ne.s32.totalorder %v539, 0
    %vm604 = vcmp.ne.s32.totalorder %v546, 0
    %vm605 = vcmp.ne.s32.totalorder %v553, 0
    %vm606 = vcmp.ne.s32.totalorder %v560, 0
    %vm607 = vcmp.ne.s32.totalorder %v567, 0
    %vm608 = vcmp.ne.s32.totalorder %v574, 0
    %vm609 = vcmp.ne.s32.totalorder %v581, 0
    %vm610 = vcmp.ne.s32.totalorder %v588, 0
    %vm611 = vcmp.ne.s32.totalorder %v595, 0
    %vm612 = vcmp.lt.s32.totalorder %v490, 0
    %vm613 = vcmp.lt.s32.totalorder %v497, 0
    %vm614 = vcmp.lt.s32.totalorder %v504, 0
    %vm615 = vcmp.lt.s32.totalorder %v511, 0
    %vm616 = vcmp.lt.s32.totalorder %v518, 0
    %vm617 = vcmp.lt.s32.totalorder %v525, 0
    %vm618 = vcmp.lt.s32.totalorder %v532, 0
    %vm619 = vcmp.lt.s32.totalorder %v539, 0
    %vm620 = vcmp.lt.s32.totalorder %v546, 0
    %vm621 = vcmp.lt.s32.totalorder %v553, 0
    %vm622 = vcmp.lt.s32.totalorder %v560, 0
    %vm623 = vcmp.lt.s32.totalorder %v567, 0
    %vm624 = vcmp.lt.s32.totalorder %v574, 0
    %vm625 = vcmp.lt.s32.totalorder %v581, 0
    %vm626 = vcmp.lt.s32.totalorder %v588, 0
    %vm627 = vcmp.lt.s32.totalorder %v595, 0
    %vm628 = vmand %vm612, %vm596
    %vm629 = vmand %vm613, %vm597
    %vm630 = vmand %vm614, %vm598
    %vm631 = vmand %vm615, %vm599
    %vm632 = vmand %vm616, %vm600
    %vm633 = vmand %vm617, %vm601
    %vm634 = vmand %vm618, %vm602
    %vm635 = vmand %vm619, %vm603
    %vm636 = vmand %vm620, %vm604
    %vm637 = vmand %vm621, %vm605
    %vm638 = vmand %vm622, %vm606
    %vm639 = vmand %vm623, %vm607
    %vm640 = vmand %vm624, %vm608
    %vm641 = vmand %vm625, %vm609
    %vm642 = vmand %vm626, %vm610
    %vm643 = vmand %vm627, %vm611
    %v644 = vadd.s32 %v490, 2
    %v645 = vadd.s32 %v497, 2
    %v646 = vadd.s32 %v504, 2
    %v647 = vadd.s32 %v511, 2
    %v648 = vadd.s32 %v518, 2
    %v649 = vadd.s32 %v525, 2
    %v650 = vadd.s32 %v532, 2
    %v651 = vadd.s32 %v539, 2
    %v652 = vadd.s32 %v546, 2
    %v653 = vadd.s32 %v553, 2
    %v654 = vadd.s32 %v560, 2
    %v655 = vadd.s32 %v567, 2
    %v656 = vadd.s32 %v574, 2
    %v657 = vadd.s32 %v581, 2
    %v658 = vadd.s32 %v588, 2
    %v659 = vadd.s32 %v595, 2
    %v660 = vsel %vm628, %v644, %v490
    %v661 = vsel %vm629, %v645, %v497
    %v662 = vsel %vm630, %v646, %v504
    %v663 = vsel %vm631, %v647, %v511
    %v664 = vsel %vm632, %v648, %v518
    %v665 = vsel %vm633, %v649, %v525
    %v666 = vsel %vm634, %v650, %v532
    %v667 = vsel %vm635, %v651, %v539
    %v668 = vsel %vm636, %v652, %v546
    %v669 = vsel %vm637, %v653, %v553
    %v670 = vsel %vm638, %v654, %v560
    %v671 = vsel %vm639, %v655, %v567
    %v672 = vsel %vm640, %v656, %v574
    %v673 = vsel %vm641, %v657, %v581
    %v674 = vsel %vm642, %v658, %v588
    %v675 = vsel %vm643, %v659, %v595
    %v676 = vlaneseq
    %v677 = vand.u32 %v676, 127
    %vm678 = vcmp.lt.s32.totalorder %v677, 0
    %v679 = vsub.s32 0, %v677
    %v680 = vsel %vm678, %v679, %v677
    %v681 = vshrl.u32 %v680, 1
    %v682 = vand.u32 %v680, 1
    %v683 = vsub.s32 0, %v682
    %v684 = vsel %vm678, %v683, %v682
    %vm685 = vcmp.ne.s32.totalorder %v684, 0
    %vm686 = vcmp.lt.s32.totalorder %v684, 0
    %vm687 = vmand %vm686, %vm685
    %v688 = vadd.s32 %v684, 2
    %v689 = vsel %vm687, %v688, %v684
    %vm690 = vcmp.eq.s32.totalorder %v660, %v689
    %vm691 = vcmp.eq.s32.totalorder %v661, %v689
    %vm692 = vcmp.eq.s32.totalorder %v662, %v689
    %vm693 = vcmp.eq.s32.totalorder %v663, %v689
    %vm694 = vcmp.eq.s32.totalorder %v664, %v689
    %vm695 = vcmp.eq.s32.totalorder %v665, %v689
    %vm696 = vcmp.eq.s32.totalorder %v666, %v689
    %vm697 = vcmp.eq.s32.totalorder %v667, %v689
    %vm698 = vcmp.eq.s32.totalorder %v668, %v689
    %vm699 = vcmp.eq.s32.totalorder %v669, %v689
    %vm700 = vcmp.eq.s32.totalorder %v670, %v689
    %vm701 = vcmp.eq.s32.totalorder %v671, %v689
    %vm702 = vcmp.eq.s32.totalorder %v672, %v689
    %vm703 = vcmp.eq.s32.totalorder %v673, %v689
    %vm704 = vcmp.eq.s32.totalorder %v674, %v689
    %vm705 = vcmp.eq.s32.totalorder %v675, %v689
    %v706 = vsel %vm690, %v389, -1e+30
    %v707 = vsel %vm691, %v394, -1e+30
    %v708 = vsel %vm692, %v399, -1e+30
    %v709 = vsel %vm693, %v404, -1e+30
    %v710 = vsel %vm694, %v409, -1e+30
    %v711 = vsel %vm695, %v414, -1e+30
    %v712 = vsel %vm696, %v419, -1e+30
    %v713 = vsel %vm697, %v424, -1e+30
    %v714 = vsel %vm698, %v429, -1e+30
    %v715 = vsel %vm699, %v434, -1e+30
    %v716 = vsel %vm700, %v439, -1e+30
    %v717 = vsel %vm701, %v444, -1e+30
    %v718 = vsel %vm702, %v449, -1e+30
    %v719 = vsel %vm703, %v454, -1e+30
    %v720 = vsel %vm704, %v459, -1e+30
    %v721 = vsel %vm705, %v464, -1e+30
    %vm722 = vcmask 130048
    %v723 = vsel %vm722, %v706, -inf
    %724 = vmax.xlane.f32.xlu0 %v723
    %v725 = vpop.xlane.xlu0 %724
    %v726 = vsel %vm722, %v707, -inf
    %727 = vmax.xlane.f32.xlu0 %v726
    %v728 = vpop.xlane.xlu0 %727
    %v729 = vsel %vm722, %v708, -inf
    %730 = vmax.xlane.f32.xlu0 %v729
    %v731 = vpop.xlane.xlu0 %730
    %v732 = vsel %vm722, %v709, -inf
    %733 = vmax.xlane.f32.xlu0 %v732
    %v734 = vpop.xlane.xlu0 %733
    %v735 = vsel %vm722, %v710, -inf
    %736 = vmax.xlane.f32.xlu0 %v735
    %v737 = vpop.xlane.xlu0 %736
    %v738 = vsel %vm722, %v711, -inf
    %739 = vmax.xlane.f32.xlu0 %v738
    %v740 = vpop.xlane.xlu0 %739
    %v741 = vsel %vm722, %v712, -inf
    %742 = vmax.xlane.f32.xlu0 %v741
    %v743 = vpop.xlane.xlu0 %742
    %v744 = vsel %vm722, %v713, -inf
    %745 = vmax.xlane.f32.xlu0 %v744
    %v746 = vpop.xlane.xlu0 %745
    %v747 = vsel %vm722, %v714, -inf
    %748 = vmax.xlane.f32.xlu0 %v747
    %v749 = vpop.xlane.xlu0 %748
    %v750 = vsel %vm722, %v715, -inf
    %751 = vmax.xlane.f32.xlu0 %v750
    %v752 = vpop.xlane.xlu0 %751
    %v753 = vsel %vm722, %v716, -inf
    %754 = vmax.xlane.f32.xlu0 %v753
    %v755 = vpop.xlane.xlu0 %754
    %v756 = vsel %vm722, %v717, -inf
    %757 = vmax.xlane.f32.xlu0 %v756
    %v758 = vpop.xlane.xlu0 %757
    %v759 = vsel %vm722, %v718, -inf
    %760 = vmax.xlane.f32.xlu0 %v759
    %v761 = vpop.xlane.xlu0 %760
    %v762 = vsel %vm722, %v719, -inf
    %763 = vmax.xlane.f32.xlu0 %v762
    %v764 = vpop.xlane.xlu0 %763
    %v765 = vsel %vm722, %v720, -inf
    %766 = vmax.xlane.f32.xlu0 %v765
    %v767 = vpop.xlane.xlu0 %766
    %v768 = vsel %vm722, %v721, -inf
    %769 = vmax.xlane.f32.xlu0 %v768
    %v770 = vpop.xlane.xlu0 %769
    %v771 = vsub.f32 %v706, %v725
    %v772 = vsub.f32 %v707, %v728
    %v773 = vsub.f32 %v708, %v731
    %v774 = vsub.f32 %v709, %v734
    %v775 = vsub.f32 %v710, %v737
    %v776 = vsub.f32 %v711, %v740
    %v777 = vsub.f32 %v712, %v743
    %v778 = vsub.f32 %v713, %v746
    %v779 = vsub.f32 %v714, %v749
    %v780 = vsub.f32 %v715, %v752
    %v781 = vsub.f32 %v716, %v755
    %v782 = vsub.f32 %v717, %v758
    %v783 = vsub.f32 %v718, %v761
    %v784 = vsub.f32 %v719, %v764
    %v785 = vsub.f32 %v720, %v767
    %v786 = vsub.f32 %v721, %v770
    %v787 = vmul.f32 %v771, 1.442695
    %v788 = vpow.pop %v787
    %v789 = vmul.f32 %v772, 1.442695
    %v790 = vpow.pop %v789
    %v791 = vmul.f32 %v773, 1.442695
    %v792 = vpow.pop %v791
    %v793 = vmul.f32 %v774, 1.442695
    %v794 = vpow.pop %v793
    %v795 = vmul.f32 %v775, 1.442695
    %v796 = vpow.pop %v795
    %v797 = vmul.f32 %v776, 1.442695
    %v798 = vpow.pop %v797
    %v799 = vmul.f32 %v777, 1.442695
    %v800 = vpow.pop %v799
    %v801 = vmul.f32 %v778, 1.442695
    %v802 = vpow.pop %v801
    %v803 = vmul.f32 %v779, 1.442695
    %v804 = vpow.pop %v803
    %v805 = vmul.f32 %v780, 1.442695
    %v806 = vpow.pop %v805
    %v807 = vmul.f32 %v781, 1.442695
    %v808 = vpow.pop %v807
    %v809 = vmul.f32 %v782, 1.442695
    %v810 = vpow.pop %v809
    %v811 = vmul.f32 %v783, 1.442695
    %v812 = vpow.pop %v811
    %v813 = vmul.f32 %v784, 1.442695
    %v814 = vpow.pop %v813
    %v815 = vmul.f32 %v785, 1.442695
    %v816 = vpow.pop %v815
    %v817 = vmul.f32 %v786, 1.442695
    %v818 = vpow.pop %v817
    %v819 = vsel %vm722, %v788, 0.0
    %820 = vadd.xlane.f32.xlu0 %v819
    %v821 = vpop.xlane.xlu0 %820
    %v822 = vsel %vm722, %v790, 0.0
    %823 = vadd.xlane.f32.xlu0 %v822
    %v824 = vpop.xlane.xlu0 %823
    %v825 = vsel %vm722, %v792, 0.0
    %826 = vadd.xlane.f32.xlu0 %v825
    %v827 = vpop.xlane.xlu0 %826
    %v828 = vsel %vm722, %v794, 0.0
    %829 = vadd.xlane.f32.xlu0 %v828
    %v830 = vpop.xlane.xlu0 %829
    %v831 = vsel %vm722, %v796, 0.0
    %832 = vadd.xlane.f32.xlu0 %v831
    %v833 = vpop.xlane.xlu0 %832
    %v834 = vsel %vm722, %v798, 0.0
    %835 = vadd.xlane.f32.xlu0 %v834
    %v836 = vpop.xlane.xlu0 %835
    %v837 = vsel %vm722, %v800, 0.0
    %838 = vadd.xlane.f32.xlu0 %v837
    %v839 = vpop.xlane.xlu0 %838
    %v840 = vsel %vm722, %v802, 0.0
    %841 = vadd.xlane.f32.xlu0 %v840
    %v842 = vpop.xlane.xlu0 %841
    %v843 = vsel %vm722, %v804, 0.0
    %844 = vadd.xlane.f32.xlu0 %v843
    %v845 = vpop.xlane.xlu0 %844
    %v846 = vsel %vm722, %v806, 0.0
    %847 = vadd.xlane.f32.xlu0 %v846
    %v848 = vpop.xlane.xlu0 %847
    %v849 = vsel %vm722, %v808, 0.0
    %850 = vadd.xlane.f32.xlu0 %v849
    %v851 = vpop.xlane.xlu0 %850
    %v852 = vsel %vm722, %v810, 0.0
    %853 = vadd.xlane.f32.xlu0 %v852
    %v854 = vpop.xlane.xlu0 %853
    %v855 = vsel %vm722, %v812, 0.0
    %856 = vadd.xlane.f32.xlu0 %v855
    %v857 = vpop.xlane.xlu0 %856
    %v858 = vsel %vm722, %v814, 0.0
    %859 = vadd.xlane.f32.xlu0 %v858
    %v860 = vpop.xlane.xlu0 %859
    %v861 = vsel %vm722, %v816, 0.0
    %862 = vadd.xlane.f32.xlu0 %v861
    %v863 = vpop.xlane.xlu0 %862
    %v864 = vsel %vm722, %v818, 0.0
    %865 = vadd.xlane.f32.xlu0 %v864
    %v866 = vpop.xlane.xlu0 %865
    %v867 = vrcp.pop %v821
    %v868 = vrcp.pop %v824
    %v869 = vrcp.pop %v827
    %v870 = vrcp.pop %v830
    %v871 = vrcp.pop %v833
    %v872 = vrcp.pop %v836
    %v873 = vrcp.pop %v839
    %v874 = vrcp.pop %v842
    %v875 = vrcp.pop %v845
    %v876 = vrcp.pop %v848
    %v877 = vrcp.pop %v851
    %v878 = vrcp.pop %v854
    %v879 = vrcp.pop %v857
    %v880 = vrcp.pop %v860
    %v881 = vrcp.pop %v863
    %v882 = vrcp.pop %v866
    %v883 = vmul.f32 %v788, %v867
    %v884 = vmul.f32 %v790, %v868
    %v885 = vmul.f32 %v792, %v869
    %v886 = vmul.f32 %v794, %v870
    %v887 = vmul.f32 %v796, %v871
    %v888 = vmul.f32 %v798, %v872
    %v889 = vmul.f32 %v800, %v873
    %v890 = vmul.f32 %v802, %v874
    %v891 = vmul.f32 %v804, %v875
    %v892 = vmul.f32 %v806, %v876
    %v893 = vmul.f32 %v808, %v877
    %v894 = vmul.f32 %v810, %v878
    %v895 = vmul.f32 %v812, %v879
    %v896 = vmul.f32 %v814, %v880
    %v897 = vmul.f32 %v816, %v881
    %v898 = vmul.f32 %v818, %v882
    %899 = vrot.lane.b32.xlu0 %v149, 64
    %v900 = vpop.permute.xlu0 %899
    %901 = vrot.lane.b32.xlu0 %v154, 64
    %v902 = vpop.permute.xlu0 %901
    %v906 = vsel %vm722, %v883, 0
    %v909 = vsel %vm722, %v884, 0
    %v912 = vsel %vm722, %v885, 0
    %v915 = vsel %vm722, %v886, 0
    %v918 = vsel %vm722, %v887, 0
    %v921 = vsel %vm722, %v888, 0
    %v924 = vsel %vm722, %v889, 0
    %v927 = vsel %vm722, %v890, 0
    %v930 = vsel %vm722, %v891, 0
    %v933 = vsel %vm722, %v892, 0
    %v936 = vsel %vm722, %v893, 0
    %v939 = vsel %vm722, %v894, 0
    %v942 = vsel %vm722, %v895, 0
    %v945 = vsel %vm722, %v896, 0
    %v948 = vsel %vm722, %v897, 0
    %v951 = vsel %vm722, %v898, 0
    %953 = vmatprep.subr.mxu0 0.0
    %954 = vmatpush1.msra.mxu0 0.0
    %955 = vmatprep.subr.mxu0 0.0
    %956 = vmatpush1.msra.mxu0 0.0
    %957 = vmatprep.subr.mxu0 0.0
    %958 = vmatpush1.msra.mxu0 0.0
    %959 = vmatprep.subr.mxu0 0.0
    %960 = vmatpush1.msra.mxu0 0.0
    %961 = vmatprep.subr.mxu0 0.0
    %962 = vmatpush1.msra.mxu0 0.0
    %963 = vmatprep.subr.mxu0 0.0
    %964 = vmatpush1.msra.mxu0 0.0
    %965 = vmatprep.subr.mxu0 0.0
    %966 = vmatpush1.msra.mxu0 0.0
    %967 = vmatprep.subr.mxu0 0.0
    %968 = vmatpush1.msra.mxu0 0.0
    %969 = vmatprep.subr.mxu0 0.0
    %970 = vmatpush1.msra.mxu0 0.0
    %971 = vmatprep.subr.mxu0 0.0
    %972 = vmatpush1.msra.mxu0 0.0
    %973 = vmatprep.subr.mxu0 0.0
    %974 = vmatpush1.msra.mxu0 0.0
    %975 = vmatprep.subr.mxu0 0.0
    %976 = vmatpush1.msra.mxu0 0.0
    %977 = vmatprep.subr.mxu0 0.0
    %978 = vmatpush1.msra.mxu0 0.0
    %979 = vmatprep.subr.mxu0 0.0
    %980 = vmatpush1.msra.mxu0 0.0
    %981 = vmatprep.subr.mxu0 0.0
    %982 = vmatpush1.msra.mxu0 %v902
    %983 = vmatprep.subr.mxu0 0.0
    %984 = vmatpush1.msra.mxu0 %v900
    %985 = vmatprep.subr.mxu0 0.0
    %986 = vmatpush2.msra.mxu0 0.0
    %987 = vmatprep.subr.mxu0 0.0
    %988 = vmatpush2.msra.mxu0 0.0
    %989 = vmatprep.subr.mxu0 0.0
    %990 = vmatpush2.msra.mxu0 0.0
    %991 = vmatprep.subr.mxu0 0.0
    %992 = vmatpush2.msra.mxu0 0.0
    %993 = vmatprep.subr.mxu0 0.0
    %994 = vmatpush2.msra.mxu0 0.0
    %995 = vmatprep.subr.mxu0 0.0
    %996 = vmatpush2.msra.mxu0 0.0
    %997 = vmatprep.subr.mxu0 0.0
    %998 = vmatpush2.msra.mxu0 0.0
    %999 = vmatprep.subr.mxu0 0.0
    %1000 = vmatpush2.msra.mxu0 0.0
    %1001 = vmatprep.subr.mxu0 0.0
    %1002 = vmatpush2.msra.mxu0 0.0
    %1003 = vmatprep.subr.mxu0 0.0
    %1004 = vmatpush2.msra.mxu0 0.0
    %1005 = vmatprep.subr.mxu0 0.0
    %1006 = vmatpush2.msra.mxu0 0.0
    %1007 = vmatprep.subr.mxu0 0.0
    %1008 = vmatpush2.msra.mxu0 0.0
    %1009 = vmatprep.subr.mxu0 0.0
    %1010 = vmatpush2.msra.mxu0 0.0
    %1011 = vmatprep.subr.mxu0 0.0
    %1012 = vmatpush2.msra.mxu0 0.0
    %1013 = vmatprep.subr.mxu0 0.0
    %1014 = vmatpush2.msra.mxu0 0.0
    %1015 = vmatprep.subr.mxu0 0.0
    %1016 = vmatpush2.msra.mxu0 0.0
    %1017 = vmatprep.mubr.f32.mxu0 0.0
    %1018 = vmatmul.mubr.f32.gmra.mxu0 %v906
    %v1019 = vpop.f32.mrf.mxu0
    %v1020 = vadd.f32 0.0, %v1019
    %v1021 = vpop.f32.mrf.mxu0
    %1022 = vmatprep.mubr.f32.mxu0 0.0
    %1023 = vmatmul.mubr.f32.gmra.mxu0 %v909
    %v1024 = vpop.f32.mrf.mxu0
    %v1025 = vadd.f32 0.0, %v1024
    %v1026 = vpop.f32.mrf.mxu0
    %1027 = vmatprep.mubr.f32.mxu0 0.0
    %1028 = vmatmul.mubr.f32.gmra.mxu0 %v912
    %v1029 = vpop.f32.mrf.mxu0
    %v1030 = vadd.f32 0.0, %v1029
    %v1031 = vpop.f32.mrf.mxu0
    %1032 = vmatprep.mubr.f32.mxu0 0.0
    %1033 = vmatmul.mubr.f32.gmra.mxu0 %v915
    %v1034 = vpop.f32.mrf.mxu0
    %v1035 = vadd.f32 0.0, %v1034
    %v1036 = vpop.f32.mrf.mxu0
    %1037 = vmatprep.mubr.f32.mxu0 0.0
    %1038 = vmatmul.mubr.f32.gmra.mxu0 %v918
    %v1039 = vpop.f32.mrf.mxu0
    %v1040 = vadd.f32 0.0, %v1039
    %v1041 = vpop.f32.mrf.mxu0
    %1042 = vmatprep.mubr.f32.mxu0 0.0
    %1043 = vmatmul.mubr.f32.gmra.mxu0 %v921
    %v1044 = vpop.f32.mrf.mxu0
    %v1045 = vadd.f32 0.0, %v1044
    %v1046 = vpop.f32.mrf.mxu0
    %1047 = vmatprep.mubr.f32.mxu0 0.0
    %1048 = vmatmul.mubr.f32.gmra.mxu0 %v924
    %v1049 = vpop.f32.mrf.mxu0
    %v1050 = vadd.f32 0.0, %v1049
    %v1051 = vpop.f32.mrf.mxu0
    %1052 = vmatprep.mubr.f32.mxu0 0.0
    %1053 = vmatmul.mubr.f32.gmra.mxu0 %v927
    %v1054 = vpop.f32.mrf.mxu0
    %v1055 = vadd.f32 0.0, %v1054
    %v1056 = vpop.f32.mrf.mxu0
    %1057 = vmatprep.mubr.f32.mxu0 0.0
    %1058 = vmatmul.mubr.f32.gmra.mxu0 %v930
    %v1059 = vpop.f32.mrf.mxu0
    %v1060 = vadd.f32 0.0, %v1059
    %v1061 = vpop.f32.mrf.mxu0
    %1062 = vmatprep.mubr.f32.mxu0 0.0
    %1063 = vmatmul.mubr.f32.gmra.mxu0 %v933
    %v1064 = vpop.f32.mrf.mxu0
    %v1065 = vadd.f32 0.0, %v1064
    %v1066 = vpop.f32.mrf.mxu0
    %1067 = vmatprep.mubr.f32.mxu0 0.0
    %1068 = vmatmul.mubr.f32.gmra.mxu0 %v936
    %v1069 = vpop.f32.mrf.mxu0
    %v1070 = vadd.f32 0.0, %v1069
    %v1071 = vpop.f32.mrf.mxu0
    %1072 = vmatprep.mubr.f32.mxu0 0.0
    %1073 = vmatmul.mubr.f32.gmra.mxu0 %v939
    %v1074 = vpop.f32.mrf.mxu0
    %v1075 = vadd.f32 0.0, %v1074
    %v1076 = vpop.f32.mrf.mxu0
    %1077 = vmatprep.mubr.f32.mxu0 0.0
    %1078 = vmatmul.mubr.f32.gmra.mxu0 %v942
    %v1079 = vpop.f32.mrf.mxu0
    %v1080 = vadd.f32 0.0, %v1079
    %v1081 = vpop.f32.mrf.mxu0
    %1082 = vmatprep.mubr.f32.mxu0 0.0
    %1083 = vmatmul.mubr.f32.gmra.mxu0 %v945
    %v1084 = vpop.f32.mrf.mxu0
    %v1085 = vadd.f32 0.0, %v1084
    %v1086 = vpop.f32.mrf.mxu0
    %1087 = vmatprep.mubr.f32.mxu0 0.0
    %1088 = vmatmul.mubr.f32.gmra.mxu0 %v948
    %v1089 = vpop.f32.mrf.mxu0
    %v1090 = vadd.f32 0.0, %v1089
    %v1091 = vpop.f32.mrf.mxu0
    %1092 = vmatprep.mubr.f32.mxu0 0.0
    %1093 = vmatmul.mubr.f32.gmra.mxu0 %v951
    %v1094 = vpop.f32.mrf.mxu0
    %v1095 = vadd.f32 0.0, %v1094
    %v1096 = vpop.f32.mrf.mxu0
    %1097 = vdwg.mxu0
    %v1098 = vmul.f32 %v1020, %v211
    %v1099 = vmul.f32 %v1025, %v211
    %v1100 = vmul.f32 %v1030, %v215
    %v1101 = vmul.f32 %v1035, %v215
    %v1102 = vmul.f32 %v1040, %v219
    %v1103 = vmul.f32 %v1045, %v219
    %v1104 = vmul.f32 %v1050, %v223
    %v1105 = vmul.f32 %v1055, %v223
    %v1106 = vmul.f32 %v1060, %v227
    %v1107 = vmul.f32 %v1065, %v227
    %v1108 = vmul.f32 %v1070, %v231
    %v1109 = vmul.f32 %v1075, %v231
    %v1110 = vmul.f32 %v1080, %v235
    %v1111 = vmul.f32 %v1085, %v235
    %v1112 = vmul.f32 %v1090, %v239
    %v1113 = vmul.f32 %v1095, %v239
    %v1114 = vsel %vm75, %v1098, 0.0
    %v1115 = vsel %vm75, %v1100, 0.0
    %v1116 = vadd.f32 %v1114, %v1115
    %v1117 = vsel %vm75, %v1102, 0.0
    %v1118 = vadd.f32 %v1116, %v1117
    %v1119 = vsel %vm75, %v1104, 0.0
    %v1120 = vadd.f32 %v1118, %v1119
    %v1121 = vsel %vm75, %v1106, 0.0
    %v1122 = vadd.f32 %v1120, %v1121
    %v1123 = vsel %vm75, %v1108, 0.0
    %v1124 = vadd.f32 %v1122, %v1123
    %v1125 = vsel %vm75, %v1110, 0.0
    %v1126 = vadd.f32 %v1124, %v1125
    %v1127 = vsel %vm75, %v1112, 0.0
    %v1128 = vadd.f32 %v1126, %v1127
    %v1129 = vsel %vm75, %v1099, 0.0
    %v1130 = vsel %vm75, %v1101, 0.0
    %v1131 = vadd.f32 %v1129, %v1130
    %v1132 = vsel %vm75, %v1103, 0.0
    %v1133 = vadd.f32 %v1131, %v1132
    %v1134 = vsel %vm75, %v1105, 0.0
    %v1135 = vadd.f32 %v1133, %v1134
    %v1136 = vsel %vm75, %v1107, 0.0
    %v1137 = vadd.f32 %v1135, %v1136
    %v1138 = vsel %vm75, %v1109, 0.0
    %v1139 = vadd.f32 %v1137, %v1138
    %v1140 = vsel %vm75, %v1111, 0.0
    %v1141 = vadd.f32 %v1139, %v1140
    %v1142 = vsel %vm75, %v1113, 0.0
    %v1143 = vadd.f32 %v1141, %v1142
    %v1144 = vld [vmem:[%s2] sm:$0xff]
    %v1145 = vld [vmem:[%s2 + $0x8] sm:$0xff]
    %v1146 = vld [vmem:[%s2 + $0x10] sm:$0xff]
    %v1147 = vld [vmem:[%s2 + $0x18] sm:$0xff]
    %v1148 = vlaneseq
    %v1149 = vshrl.u32 %v1148, 7
    %v1150 = vsub.s32 1, %v1149
    %v1151 = vrot.slane %v66, %v1150
    %v1153 = vsel %vm75, %v1128, 0
    %v1156 = vsel %vm75, %v1143, 0
    %1158 = vmatprep.subr.mxu0 0.0
    %1159 = vmatpush1.msra.mxu0 0.0
    %1160 = vmatprep.subr.mxu0 0.0
    %1161 = vmatpush1.msra.mxu0 0.0
    %1162 = vmatprep.subr.mxu0 0.0
    %1163 = vmatpush1.msra.mxu0 0.0
    %1164 = vmatprep.subr.mxu0 0.0
    %1165 = vmatpush1.msra.mxu0 0.0
    %1166 = vmatprep.subr.mxu0 0.0
    %1167 = vmatpush1.msra.mxu0 0.0
    %1168 = vmatprep.subr.mxu0 0.0
    %1169 = vmatpush1.msra.mxu0 0.0
    %1170 = vmatprep.subr.mxu0 0.0
    %1171 = vmatpush1.msra.mxu0 0.0
    %1172 = vmatprep.subr.mxu0 0.0
    %1173 = vmatpush1.msra.mxu0 0.0
    %1174 = vmatprep.subr.mxu0 0.0
    %1175 = vmatpush1.msra.mxu0 0.0
    %1176 = vmatprep.subr.mxu0 0.0
    %1177 = vmatpush1.msra.mxu0 0.0
    %1178 = vmatprep.subr.mxu0 0.0
    %1179 = vmatpush1.msra.mxu0 0.0
    %1180 = vmatprep.subr.mxu0 0.0
    %1181 = vmatpush1.msra.mxu0 0.0
    %1182 = vmatprep.subr.mxu0 0.0
    %1183 = vmatpush1.msra.mxu0 %v1147
    %1184 = vmatprep.subr.mxu0 0.0
    %1185 = vmatpush1.msra.mxu0 %v1146
    %1186 = vmatprep.subr.mxu0 0.0
    %1187 = vmatpush1.msra.mxu0 %v1145
    %1188 = vmatprep.subr.mxu0 0.0
    %1189 = vmatpush1.msra.mxu0 %v1144
    %1190 = vmatprep.subr.mxu0 0.0
    %1191 = vmatpush2.msra.mxu0 0.0
    %1192 = vmatprep.subr.mxu0 0.0
    %1193 = vmatpush2.msra.mxu0 0.0
    %1194 = vmatprep.subr.mxu0 0.0
    %1195 = vmatpush2.msra.mxu0 0.0
    %1196 = vmatprep.subr.mxu0 0.0
    %1197 = vmatpush2.msra.mxu0 0.0
    %1198 = vmatprep.subr.mxu0 0.0
    %1199 = vmatpush2.msra.mxu0 0.0
    %1200 = vmatprep.subr.mxu0 0.0
    %1201 = vmatpush2.msra.mxu0 0.0
    %1202 = vmatprep.subr.mxu0 0.0
    %1203 = vmatpush2.msra.mxu0 0.0
    %1204 = vmatprep.subr.mxu0 0.0
    %1205 = vmatpush2.msra.mxu0 0.0
    %1206 = vmatprep.subr.mxu0 0.0
    %1207 = vmatpush2.msra.mxu0 0.0
    %1208 = vmatprep.subr.mxu0 0.0
    %1209 = vmatpush2.msra.mxu0 0.0
    %1210 = vmatprep.subr.mxu0 0.0
    %1211 = vmatpush2.msra.mxu0 0.0
    %1212 = vmatprep.subr.mxu0 0.0
    %1213 = vmatpush2.msra.mxu0 0.0
    %1214 = vmatprep.subr.mxu0 0.0
    %1215 = vmatpush2.msra.mxu0 0.0
    %1216 = vmatprep.subr.mxu0 0.0
    %1217 = vmatpush2.msra.mxu0 0.0
    %1218 = vmatprep.subr.mxu0 0.0
    %1219 = vmatpush2.msra.mxu0 0.0
    %1220 = vmatprep.subr.mxu0 0.0
    %1221 = vmatpush2.msra.mxu0 0.0
    %1222 = vmatprep.mubr.f32.mxu0 0.0
    %1223 = vmatmul.mubr.f32.gmra.mxu0 %v1153
    %v1224 = vpop.f32.mrf.mxu0
    %v1225 = vadd.f32 %v1151, %v1224
    %v1226 = vpop.f32.mrf.mxu0
    %1227 = vmatprep.mubr.f32.mxu0 0.0
    %1228 = vmatmul.mubr.f32.gmra.mxu0 %v1156
    %v1229 = vpop.f32.mrf.mxu0
    %v1230 = vadd.f32 %v1151, %v1229
    %v1231 = vpop.f32.mrf.mxu0
    %1232 = vdwg.mxu0
    %v1233 = vadd.f32 %v64, %v1225
    %v1234 = vadd.f32 %v65, %v1230
    %v1235 = vsel %vm75, %v1233, 0.0
    %1236 = vadd.xlane.f32.xlu0 %v1235
    %v1237 = vpop.xlane.xlu0 %1236
    %v1238 = vsel %vm75, %v1234, 0.0
    %1239 = vadd.xlane.f32.xlu0 %v1238
    %v1240 = vpop.xlane.xlu0 %1239
    %v1241 = vrcp.pop 32.0
    %v1242 = vmul.f32 %v1237, %v1241
    %v1243 = vmul.f32 %v1240, %v1241
    %v1244 = vsub.f32 %v1233, %v1242
    %v1245 = vsub.f32 %v1234, %v1243
    %v1246 = vmul.f32 %v1244, %v1244
    %v1247 = vmul.f32 %v1245, %v1245
    %v1248 = vsel %vm75, %v1246, 0.0
    %1249 = vadd.xlane.f32.xlu0 %v1248
    %v1250 = vpop.xlane.xlu0 %1249
    %v1251 = vsel %vm75, %v1247, 0.0
    %1252 = vadd.xlane.f32.xlu0 %v1251
    %v1253 = vpop.xlane.xlu0 %1252
    %v1254 = vmul.f32 %v1250, %v1241
    %v1255 = vmul.f32 %v1253, %v1241
    %v1256 = vadd.f32 %v1254, 1e-05
    %v1257 = vadd.f32 %v1255, 1e-05
    %v1258 = vrsqrt.pop %v1256
    %v1259 = vrsqrt.pop %v1257
    %v1260 = vmul.f32 %v1244, %v1258
    %v1261 = vmul.f32 %v1245, %v1259
    %v1262 = vlaneseq
    %v1263 = vshrl.u32 %v1262, 7
    %v1264 = vsub.s32 4, %v1263
    %v1265 = vrot.slane %v66, %v1264
    %v1266 = vmul.f32 %v1260, %v1265
    %v1267 = vmul.f32 %v1261, %v1265
    %v1268 = vlaneseq
    %v1269 = vshrl.u32 %v1268, 7
    %v1270 = vsub.s32 5, %v1269
    %v1271 = vrot.slane %v66, %v1270
    %v1272 = vadd.f32 %v1266, %v1271
    %v1273 = vadd.f32 %v1267, %v1271
    %v1274 = vld [vmem:[%s3] sm:$0xff]
    %v1275 = vld [vmem:[%s3 + $0x8] sm:$0xff]
    %v1276 = vld [vmem:[%s3 + $0x10] sm:$0xff]
    %v1277 = vld [vmem:[%s3 + $0x18] sm:$0xff]
    %v1278 = vlaneseq
    %v1279 = vshrl.u32 %v1278, 7
    %v1280 = vsub.s32 2, %v1279
    %v1281 = vrot.slane %v66, %v1280
    %v1283 = vsel %vm75, %v1272, 0
    %v1286 = vsel %vm75, %v1273, 0
    %1288 = vmatprep.subr.mxu0 0.0
    %1289 = vmatpush1.msra.mxu0 0.0
    %1290 = vmatprep.subr.mxu0 0.0
    %1291 = vmatpush1.msra.mxu0 0.0
    %1292 = vmatprep.subr.mxu0 0.0
    %1293 = vmatpush1.msra.mxu0 0.0
    %1294 = vmatprep.subr.mxu0 0.0
    %1295 = vmatpush1.msra.mxu0 0.0
    %1296 = vmatprep.subr.mxu0 0.0
    %1297 = vmatpush1.msra.mxu0 0.0
    %1298 = vmatprep.subr.mxu0 0.0
    %1299 = vmatpush1.msra.mxu0 0.0
    %1300 = vmatprep.subr.mxu0 0.0
    %1301 = vmatpush1.msra.mxu0 0.0
    %1302 = vmatprep.subr.mxu0 0.0
    %1303 = vmatpush1.msra.mxu0 0.0
    %1304 = vmatprep.subr.mxu0 0.0
    %1305 = vmatpush1.msra.mxu0 0.0
    %1306 = vmatprep.subr.mxu0 0.0
    %1307 = vmatpush1.msra.mxu0 0.0
    %1308 = vmatprep.subr.mxu0 0.0
    %1309 = vmatpush1.msra.mxu0 0.0
    %1310 = vmatprep.subr.mxu0 0.0
    %1311 = vmatpush1.msra.mxu0 0.0
    %1312 = vmatprep.subr.mxu0 0.0
    %1313 = vmatpush1.msra.mxu0 %v1277
    %1314 = vmatprep.subr.mxu0 0.0
    %1315 = vmatpush1.msra.mxu0 %v1276
    %1316 = vmatprep.subr.mxu0 0.0
    %1317 = vmatpush1.msra.mxu0 %v1275
    %1318 = vmatprep.subr.mxu0 0.0
    %1319 = vmatpush1.msra.mxu0 %v1274
    %1320 = vmatprep.subr.mxu0 0.0
    %1321 = vmatpush2.msra.mxu0 0.0
    %1322 = vmatprep.subr.mxu0 0.0
    %1323 = vmatpush2.msra.mxu0 0.0
    %1324 = vmatprep.subr.mxu0 0.0
    %1325 = vmatpush2.msra.mxu0 0.0
    %1326 = vmatprep.subr.mxu0 0.0
    %1327 = vmatpush2.msra.mxu0 0.0
    %1328 = vmatprep.subr.mxu0 0.0
    %1329 = vmatpush2.msra.mxu0 0.0
    %1330 = vmatprep.subr.mxu0 0.0
    %1331 = vmatpush2.msra.mxu0 0.0
    %1332 = vmatprep.subr.mxu0 0.0
    %1333 = vmatpush2.msra.mxu0 0.0
    %1334 = vmatprep.subr.mxu0 0.0
    %1335 = vmatpush2.msra.mxu0 0.0
    %1336 = vmatprep.subr.mxu0 0.0
    %1337 = vmatpush2.msra.mxu0 0.0
    %1338 = vmatprep.subr.mxu0 0.0
    %1339 = vmatpush2.msra.mxu0 0.0
    %1340 = vmatprep.subr.mxu0 0.0
    %1341 = vmatpush2.msra.mxu0 0.0
    %1342 = vmatprep.subr.mxu0 0.0
    %1343 = vmatpush2.msra.mxu0 0.0
    %1344 = vmatprep.subr.mxu0 0.0
    %1345 = vmatpush2.msra.mxu0 0.0
    %1346 = vmatprep.subr.mxu0 0.0
    %1347 = vmatpush2.msra.mxu0 0.0
    %1348 = vmatprep.subr.mxu0 0.0
    %1349 = vmatpush2.msra.mxu0 0.0
    %1350 = vmatprep.subr.mxu0 0.0
    %1351 = vmatpush2.msra.mxu0 0.0
    %1352 = vmatprep.mubr.f32.mxu0 0.0
    %1353 = vmatmul.mubr.f32.gmra.mxu0 %v1283
    %v1354 = vpop.f32.mrf.mxu0
    %v1355 = vadd.f32 %v1281, %v1354
    %v1356 = vpop.f32.mrf.mxu0
    %1357 = vmatprep.mubr.f32.mxu0 0.0
    %1358 = vmatmul.mubr.f32.gmra.mxu0 %v1286
    %v1359 = vpop.f32.mrf.mxu0
    %v1360 = vadd.f32 %v1281, %v1359
    %v1361 = vpop.f32.mrf.mxu0
    %1362 = vdwg.mxu0
    %v1363 = vmax.f32 %v1355, 0.0
    %v1364 = vmax.f32 %v1360, 0.0
    %v1365 = vld [vmem:[%s4] sm:$0xff]
    %v1366 = vld [vmem:[%s4 + $0x8] sm:$0xff]
    %v1367 = vld [vmem:[%s4 + $0x10] sm:$0xff]
    %v1368 = vld [vmem:[%s4 + $0x18] sm:$0xff]
    %v1369 = vld [vmem:[%s4 + $0x20] sm:$0xff]
    %v1370 = vld [vmem:[%s4 + $0x28] sm:$0xff]
    %v1371 = vld [vmem:[%s4 + $0x30] sm:$0xff]
    %v1372 = vld [vmem:[%s4 + $0x38] sm:$0xff]
    %v1373 = vlaneseq
    %v1374 = vshrl.u32 %v1373, 7
    %v1375 = vsub.s32 3, %v1374
    %v1376 = vrot.slane %v66, %v1375
    %vm1377 = vcmask 523264
    %v1379 = vsel %vm1377, %v1363, 0
    %v1382 = vsel %vm1377, %v1364, 0
    %1384 = vmatprep.subr.mxu0 0.0
    %1385 = vmatpush1.msra.mxu0 0.0
    %1386 = vmatprep.subr.mxu0 0.0
    %1387 = vmatpush1.msra.mxu0 0.0
    %1388 = vmatprep.subr.mxu0 0.0
    %1389 = vmatpush1.msra.mxu0 0.0
    %1390 = vmatprep.subr.mxu0 0.0
    %1391 = vmatpush1.msra.mxu0 0.0
    %1392 = vmatprep.subr.mxu0 0.0
    %1393 = vmatpush1.msra.mxu0 0.0
    %1394 = vmatprep.subr.mxu0 0.0
    %1395 = vmatpush1.msra.mxu0 0.0
    %1396 = vmatprep.subr.mxu0 0.0
    %1397 = vmatpush1.msra.mxu0 0.0
    %1398 = vmatprep.subr.mxu0 0.0
    %1399 = vmatpush1.msra.mxu0 0.0
    %1400 = vmatprep.subr.mxu0 0.0
    %1401 = vmatpush1.msra.mxu0 %v1372
    %1402 = vmatprep.subr.mxu0 0.0
    %1403 = vmatpush1.msra.mxu0 %v1371
    %1404 = vmatprep.subr.mxu0 0.0
    %1405 = vmatpush1.msra.mxu0 %v1370
    %1406 = vmatprep.subr.mxu0 0.0
    %1407 = vmatpush1.msra.mxu0 %v1369
    %1408 = vmatprep.subr.mxu0 0.0
    %1409 = vmatpush1.msra.mxu0 %v1368
    %1410 = vmatprep.subr.mxu0 0.0
    %1411 = vmatpush1.msra.mxu0 %v1367
    %1412 = vmatprep.subr.mxu0 0.0
    %1413 = vmatpush1.msra.mxu0 %v1366
    %1414 = vmatprep.subr.mxu0 0.0
    %1415 = vmatpush1.msra.mxu0 %v1365
    %1416 = vmatprep.subr.mxu0 0.0
    %1417 = vmatpush2.msra.mxu0 0.0
    %1418 = vmatprep.subr.mxu0 0.0
    %1419 = vmatpush2.msra.mxu0 0.0
    %1420 = vmatprep.subr.mxu0 0.0
    %1421 = vmatpush2.msra.mxu0 0.0
    %1422 = vmatprep.subr.mxu0 0.0
    %1423 = vmatpush2.msra.mxu0 0.0
    %1424 = vmatprep.subr.mxu0 0.0
    %1425 = vmatpush2.msra.mxu0 0.0
    %1426 = vmatprep.subr.mxu0 0.0
    %1427 = vmatpush2.msra.mxu0 0.0
    %1428 = vmatprep.subr.mxu0 0.0
    %1429 = vmatpush2.msra.mxu0 0.0
    %1430 = vmatprep.subr.mxu0 0.0
    %1431 = vmatpush2.msra.mxu0 0.0
    %1432 = vmatprep.subr.mxu0 0.0
    %1433 = vmatpush2.msra.mxu0 0.0
    %1434 = vmatprep.subr.mxu0 0.0
    %1435 = vmatpush2.msra.mxu0 0.0
    %1436 = vmatprep.subr.mxu0 0.0
    %1437 = vmatpush2.msra.mxu0 0.0
    %1438 = vmatprep.subr.mxu0 0.0
    %1439 = vmatpush2.msra.mxu0 0.0
    %1440 = vmatprep.subr.mxu0 0.0
    %1441 = vmatpush2.msra.mxu0 0.0
    %1442 = vmatprep.subr.mxu0 0.0
    %1443 = vmatpush2.msra.mxu0 0.0
    %1444 = vmatprep.subr.mxu0 0.0
    %1445 = vmatpush2.msra.mxu0 0.0
    %1446 = vmatprep.subr.mxu0 0.0
    %1447 = vmatpush2.msra.mxu0 0.0
    %1448 = vmatprep.mubr.f32.mxu0 0.0
    %1449 = vmatmul.mubr.f32.gmra.mxu0 %v1379
    %v1450 = vpop.f32.mrf.mxu0
    %v1451 = vadd.f32 %v1376, %v1450
    %v1452 = vpop.f32.mrf.mxu0
    %1453 = vmatprep.mubr.f32.mxu0 0.0
    %1454 = vmatmul.mubr.f32.gmra.mxu0 %v1382
    %v1455 = vpop.f32.mrf.mxu0
    %v1456 = vadd.f32 %v1376, %v1455
    %v1457 = vpop.f32.mrf.mxu0
    %1458 = vdwg.mxu0
    %v1459 = vadd.f32 %v1272, %v1451
    %v1460 = vadd.f32 %v1273, %v1456
    %v1461 = vsel %vm75, %v1459, 0.0
    %1462 = vadd.xlane.f32.xlu0 %v1461
    %v1463 = vpop.xlane.xlu0 %1462
    %v1464 = vsel %vm75, %v1460, 0.0
    %1465 = vadd.xlane.f32.xlu0 %v1464
    %v1466 = vpop.xlane.xlu0 %1465
    %v1467 = vmul.f32 %v1463, %v1241
    %v1468 = vmul.f32 %v1466, %v1241
    %v1469 = vsub.f32 %v1459, %v1467
    %v1470 = vsub.f32 %v1460, %v1468
    %v1471 = vmul.f32 %v1469, %v1469
    %v1472 = vmul.f32 %v1470, %v1470
    %v1473 = vsel %vm75, %v1471, 0.0
    %1474 = vadd.xlane.f32.xlu0 %v1473
    %v1475 = vpop.xlane.xlu0 %1474
    %v1476 = vsel %vm75, %v1472, 0.0
    %1477 = vadd.xlane.f32.xlu0 %v1476
    %v1478 = vpop.xlane.xlu0 %1477
    %v1479 = vmul.f32 %v1475, %v1241
    %v1480 = vmul.f32 %v1478, %v1241
    %v1481 = vadd.f32 %v1479, 1e-05
    %v1482 = vadd.f32 %v1480, 1e-05
    %v1483 = vrsqrt.pop %v1481
    %v1484 = vrsqrt.pop %v1482
    %v1485 = vmul.f32 %v1469, %v1483
    %v1486 = vmul.f32 %v1470, %v1484
    %v1487 = vlaneseq
    %v1488 = vshrl.u32 %v1487, 7
    %v1489 = vsub.s32 6, %v1488
    %v1490 = vrot.slane %v66, %v1489
    %v1491 = vmul.f32 %v1485, %v1490
    %v1492 = vmul.f32 %v1486, %v1490
    %v1493 = vlaneseq
    %v1494 = vshrl.u32 %v1493, 7
    %v1495 = vsub.s32 7, %v1494
    %v1496 = vrot.slane %v66, %v1495
    %v1497 = vadd.f32 %v1491, %v1496
    %v1498 = vadd.f32 %v1492, %v1496
    %1499 = vst.msk [vmem:[#allocation8] sm:$0xff] %vm75, %v1497
    %1500 = vst.msk [vmem:[#allocation8 + $0x8] sm:$0xff] %vm75, %v1498
    // Predicated region
    $region42: #{transformer_encoder_forward.1} parent=1 // pred_check
      _
    $region43: #{transformer_encoder_forward.1} parent=1 // pred_check_branch
      %1502 = sbr.rel (0) target = $region45
    $region44: #{transformer_encoder_forward.1} parent=1 // pred_region
      %s1504 = ssub.s32 256, 256
      %1505 = vsyncadd [#allocation4], %s1504
      %s1506 = sshll.u32 [#allocation8], 4
      %s1507 = int_to_ptr.vmem [resolvable:$true] %s1506
      %1512 = dma.vmem_to_hbm [thread:$0]  %s1507, 256, %s7, [#allocation4], 128, 128, 8
    $region45: #{transformer_encoder_forward.1} parent=1 // pred_fallthru
      _
    // Predicated region
    $region46: #{transformer_encoder_forward.1} parent=1 // pred_check
      _
    $region47: #{transformer_encoder_forward.1} parent=1 // pred_check_branch
      %1514 = sbr.rel (0) target = $region49
    $region48: #{transformer_encoder_forward.1} parent=1 // pred_region
      %1515 = dma.done [#allocation4], 256
    $region49: #{transformer_encoder_forward.1} parent=1 // pred_fallthru
      _
    %1516 = vsyncpa [#allocation3], 1
    %1517 = vsyncpa [#allocation6], 1
    %1518 = vsyncpa [#allocation4], 1

</llo_original>
